<compile_context>
chip_gen: v7x
topology: tpu7x:2x2x1
jax: 0.10.0
libtpu: 0.0.40
codegen_flags: <defaults>
</compile_context>

<pallas_src>
import functools
import math

import jax
import jax.numpy as jnp
from jax.experimental import pallas as pl
from jax.experimental.pallas import tpu as pltpu


# ---------------------------------------------------------------------------
# Pallas recurrent kernel: consumes precomputed input gates, runs h/c recurrence.
# ---------------------------------------------------------------------------
def _lstm_recurrent_kernel(gx_ref, whh_ref, out_ref, h_sc, c_sc, *, unroll):
    """One grid step == one (batch block, time block).

    gx_ref : (T_BLK, B_BLK, 4*Hp) bf16  precomputed x@W_ih^T + bias (gate-padded)
    whh_ref: (Hp, 4*Hp)           bf16  W_hh^T, resident in VMEM (constant block index)
    out_ref: (T_BLK, B_BLK, Hp)   f32   hidden-state outputs
    h_sc, c_sc: (B_BLK, Hp)       f32   recurrent state, persists across time blocks
    """
    tb = pl.program_id(1)   # time-block index (innermost, sequential)

    @pl.when(tb == 0)
    def _init():
        h_sc[...] = jnp.zeros_like(h_sc)
        c_sc[...] = jnp.zeros_like(c_sc)

    hp = h_sc.shape[-1]
    t_block = out_ref.shape[0]

    def _sig(v):
        # sigmoid(x) == 0.5*(tanh(0.5*x)+1): 1 EUP op instead of exp+recip.
        return 0.5 * (jnp.tanh(0.5 * v) + 1.0)

    def step(t, carry):
        h, c = carry
        # Recurrent projection on the MXU in bf16 with f32 accumulation; the weight
        # ref is read inside the loop so no (Hp,4Hp) value stays live across unrolls.
        z = gx_ref[t].astype(jnp.float32) + jnp.dot(
            h.astype(jnp.bfloat16), whh_ref[...],
            preferred_element_type=jnp.float32)
        i_g = _sig(z[:, 0 * hp:1 * hp])
        f_g = _sig(z[:, 1 * hp:2 * hp])
        g_g = jnp.tanh(z[:, 2 * hp:3 * hp])
        o_g = _sig(z[:, 3 * hp:4 * hp])
        c_new = f_g * c + i_g * g_g
        h_new = o_g * jnp.tanh(c_new)
        out_ref[t] = h_new.astype(out_ref.dtype)     # one coalesced (B_BLK, Hp) store
        return (h_new, c_new)

    # h/c live in vregs inside the block; write back to scratch once per block.
    h_fin, c_fin = jax.lax.fori_loop(0, t_block, step, (h_sc[...], c_sc[...]),
                                     unroll=unroll)
    h_sc[...] = h_fin
    c_sc[...] = c_fin


# ---------------------------------------------------------------------------
# Blocking / budget helpers
# ---------------------------------------------------------------------------
def _round_up(x, m):
    return ((x + m - 1) // m) * m


def _vmem_budget_bytes():
    """Generation-aware VMEM budget (~80% of physical, conservative fallback)."""
    try:
        cap = int(pltpu.get_tpu_info().vmem_capacity_bytes)
    except Exception:
        cap = 64 * 1024 * 1024       # safe everywhere (v7x has only 64 MiB)
    return int(cap * 0.8)


def _choose_blocks(T, B, Hp, budget):
    """Pick (T_BLK, B_BLK) so 2*gx + 2*out + W_hh + state fits the VMEM budget."""
    B_BLK = min(_round_up(max(B, 1), 8), 128)
    B_pad = _round_up(B, B_BLK)

    # Per-timestep double-buffered VMEM cost: gx slab (bf16) + out slab (f32).
    per_t = 2 * B_BLK * 4 * Hp * 2 + 2 * B_BLK * Hp * 4
    # Resident W_hh^T (bf16, assume 2 buffers) + h/c f32 state.
    fixed = 2 * Hp * 4 * Hp * 2 + 2 * B_BLK * Hp * 4
    avail = max(budget - fixed, per_t)

    T_BLK = int(max(1, min(T, 64, avail // per_t)))
    T_pad = _round_up(T, T_BLK)
    # TODO(synk): on v7x prefer >=2 batch blocks (B_BLK <= B/2) so both TensorCores
    # get work; left out because the core count is not reliably queryable here.
    return T_BLK, B_BLK, T_pad, B_pad


# ---------------------------------------------------------------------------
# pallas_call wrapper for one layer's recurrence
# ---------------------------------------------------------------------------
def _lstm_recurrence_pallas(gates_x_bf16, w_hh_t_bf16, H):
    """gates_x_bf16: (T, B, 4*Hp) bf16; w_hh_t_bf16: (Hp, 4*Hp) bf16. Returns (T,B,H) f32."""
    T, B, G = gates_x_bf16.shape
    Hp = w_hh_t_bf16.shape[0]
    assert G == 4 * Hp

    budget = _vmem_budget_bytes()
    T_BLK, B_BLK, T_pad, B_pad = _choose_blocks(T, B, Hp, budget)

    gx = gates_x_bf16
    if (T_pad, B_pad) != (T, B):
        # Padded timesteps/rows only produce discarded output (recurrence is forward-only).
        gx = jnp.pad(gx, ((0, T_pad - T), (0, B_pad - B), (0, 0)))

    grid = (B_pad // B_BLK, T_pad // T_BLK)
    unroll = min(8, T_BLK)

    out = pl.pallas_call(
        functools.partial(_lstm_recurrent_kernel, unroll=unroll),
        out_shape=jax.ShapeDtypeStruct((T_pad, B_pad, Hp), jnp.float32),
        grid_spec=pltpu.PrefetchScalarGridSpec(
            num_scalar_prefetch=0,
            grid=grid,
            in_specs=[
                # gate slab, streamed/double-buffered over the time axis
                pl.BlockSpec((T_BLK, B_BLK, 4 * Hp), lambda b, t: (t, b, 0)),
                # W_hh^T: constant block index -> fetched once, kept resident,
                # prefetched by the pipeline (no blocking manual DMA).
                pl.BlockSpec((Hp, 4 * Hp), lambda b, t: (0, 0)),
            ],
            out_specs=pl.BlockSpec((T_BLK, B_BLK, Hp), lambda b, t: (t, b, 0)),
            scratch_shapes=[
                pltpu.VMEM((B_BLK, Hp), jnp.float32),   # h state
                pltpu.VMEM((B_BLK, Hp), jnp.float32),   # c state
            ],
        ),
        compiler_params=pltpu.CompilerParams(
            # batch axis is embarrassingly parallel (megacore); time is serial.
            dimension_semantics=("parallel", "arbitrary"),
            vmem_limit_bytes=int(budget),
        ),
    )(gx, w_hh_t_bf16)

    return out[:T, :B, :H]


# ---------------------------------------------------------------------------
# Parameters + forward (equivalent of LSTMLayer.forward)
# ---------------------------------------------------------------------------
def init_lstm_params(key, in_dim, out_dim, n_layer):
    """PyTorch-style shapes: weight_ih_l{k}: (4H, Din_k), weight_hh_l{k}: (4H, H),
    bias_ih/bias_hh: (4H,). Uniform(-1/sqrt(H), 1/sqrt(H)) like torch."""
    params = []
    bound = 1.0 / math.sqrt(out_dim)
    for layer in range(n_layer):
        din = in_dim if layer == 0 else out_dim
        key, k1, k2, k3, k4 = jax.random.split(key, 5)
        w_ih = jax.random.uniform(k1, (4 * out_dim, din), jnp.float32, -bound, bound)
        w_hh = jax.random.uniform(k2, (4 * out_dim, out_dim), jnp.float32, -bound, bound)
        b_ih = jax.random.uniform(k3, (4 * out_dim,), jnp.float32, -bound, bound)
        b_hh = jax.random.uniform(k4, (4 * out_dim,), jnp.float32, -bound, bound)
        params.append((w_ih, w_hh, b_ih, b_hh))
    return params


def _pad_gate_dim(w, H, Hp):
    """Pad the trailing (4*H) gate axis to (4*Hp), zero-padding each gate block."""
    lead = w.shape[:-1]
    w4 = w.reshape(lead + (4, H))
    w4 = jnp.pad(w4, [(0, 0)] * len(lead) + [(0, 0), (0, Hp - H)])
    return w4.reshape(lead + (4 * Hp,))


def lstm_layer_forward(x_btd, params):
    """Equivalent of LSTMLayer.forward: x (B, T, in_dim) -> (B, T, out_dim).

    The batch-first -> time-major transpose is fused into the first layer's input
    projection einsum; intermediate layers stay time-major; a single final swapaxes
    restores batch-first (no per-layer HBM transposes).
    """
    h_seq = x_btd
    batch_first = True
    for (w_ih, w_hh, b_ih, b_hh) in params:
        H = w_hh.shape[1]
        Hp = _round_up(H, 128)    # lane-aligned gate blocks

        w_ih_t = _pad_gate_dim(jnp.transpose(w_ih), H, Hp)                 # (Din, 4Hp)
        bias = _pad_gate_dim((b_ih + b_hh).astype(jnp.float32), H, Hp)     # (4Hp,)
        w_hh_t = _pad_gate_dim(jnp.transpose(w_hh), H, Hp)                 # (H, 4Hp)
        w_hh_t = jnp.pad(w_hh_t, ((0, Hp - H), (0, 0))).astype(jnp.bfloat16)  # (Hp, 4Hp)

        # Hoisted input projection for ALL timesteps: one big MXU-friendly GEMM.
        eq = 'btd,dg->tbg' if batch_first else 'tbd,dg->tbg'
        gates_x = (jnp.einsum(eq, h_seq, w_ih_t,
                              preferred_element_type=jnp.float32) + bias)  # (T, B, 4Hp)
        gates_x = gates_x.astype(jnp.bfloat16)   # halve HBM traffic + VMEM slab

        h_seq = _lstm_recurrence_pallas(gates_x, w_hh_t, H)                # (T, B, H) f32
        batch_first = False
    return jnp.swapaxes(h_seq, 0, 1)                                       # (B, T, H)


# ---------------------------------------------------------------------------
# Pure-JAX reference (lax.scan), mirroring nn.LSTM semantics (f32)
# ---------------------------------------------------------------------------
def lstm_layer_ref(x_btd, params):
    x = x_btd
    for (w_ih, w_hh, b_ih, b_hh) in params:
        B, T, _ = x.shape
        H = w_hh.shape[1]

        def step(carry, x_t):
            h, c = carry
            z = x_t @ w_ih.T + h @ w_hh.T + b_ih + b_hh
            i = jax.nn.sigmoid(z[:, :H])
            f = jax.nn.sigmoid(z[:, H:2 * H])
            g = jnp.tanh(z[:, 2 * H:3 * H])
            o = jax.nn.sigmoid(z[:, 3 * H:])
            c = f * c + i * g
            h = o * jnp.tanh(c)
            return (h, c), h

        init = (jnp.zeros((B, H), jnp.float32), jnp.zeros((B, H), jnp.float32))
        _, hs = jax.lax.scan(step, init, jnp.swapaxes(x, 0, 1))
        x = jnp.swapaxes(hs, 0, 1)
    return x


if __name__ == "__main__":
    # Shapes implied by the module forward: x is (batch, seq, in_dim).
    batch, seq, in_dim, out_dim, n_layer = 2, 8, 16, 32, 2

    key = jax.random.PRNGKey(0)
    key, kx, kp = jax.random.split(key, 3)
    x = jax.random.normal(kx, (batch, seq, in_dim), jnp.float32)
    params = init_lstm_params(kp, in_dim, out_dim, n_layer)

    out = jax.block_until_ready(lstm_layer_forward(x, params))
    ref = jax.block_until_ready(lstm_layer_ref(x, params))

    assert out.shape == (batch, seq, out_dim), out.shape
    # bf16 gate slab + bf16 MXU path (f32 accumulate) -> relaxed tolerance vs f32 ref.
    assert jnp.allclose(out, ref, atol=3e-2, rtol=3e-2), float(jnp.abs(out - ref).max())
    print("KERNEL_OK")
</pallas_src>

<mosaic_0001>
module attributes {stable_mosaic.version = 11 : i64} {
  func.func @_lstm_recurrent_kernel(%arg0: i32, %arg1: i32, %arg2: memref<8x8x512xbf16, #tpu.memory_space<vmem>>, %arg3: memref<128x512xbf16, #tpu.memory_space<vmem>>, %arg4: memref<8x8x128xf32, #tpu.memory_space<vmem>>, %arg5: memref<8x128xf32, #tpu.memory_space<vmem>>, %arg6: memref<8x128xf32, #tpu.memory_space<vmem>>) attributes {dimension_semantics = [#tpu.dimension_semantics<parallel>, #tpu.dimension_semantics<arbitrary>], iteration_bounds = array<i64: 1, 1>, scalar_prefetch = 0 : i64, scratch_operands = 2 : i64, tpu.core_type = #tpu.core_type<tc>, window_params = [{transform_indices = @transform_0, window_bounds = array<i64: 8, 8, 512>}, {pipeline_mode = #tpu.pipeline_mode<synchronous>, transform_indices = @transform_1, window_bounds = array<i64: 128, 512>}, {transform_indices = @transform_2, window_bounds = array<i64: 8, 8, 128>}]} {
    %c0_i32 = arith.constant 0 : i32
    %0 = arith.cmpi eq, %arg1, %c0_i32 : i32
    %1 = arith.extui %0 : i1 to i32
    %c0_i32_0 = arith.constant 0 : i32
    %2 = arith.cmpi ne, %1, %c0_i32_0 : i32
    scf.if %2 {
      %cst_136 = arith.constant 0.000000e+00 : f32
      %351 = vector.broadcast %cst_136 : f32 to vector<8x128xf32>
      %c0_137 = arith.constant 0 : index
      %c0_138 = arith.constant 0 : index
      %352 = vector.load %arg5[%c0_137, %c0_138] : memref<8x128xf32, #tpu.memory_space<vmem>>, vector<8x128xf32>
      tpu.vector_store %arg5[%c0_137, %c0_138], %351 {strides = array<i32>} : memref<8x128xf32, #tpu.memory_space<vmem>>, vector<8x128xf32>,
      %cst_139 = arith.constant 0.000000e+00 : f32
      %353 = vector.broadcast %cst_139 : f32 to vector<8x128xf32>
      %c0_140 = arith.constant 0 : index
      %c0_141 = arith.constant 0 : index
      %354 = vector.load %arg6[%c0_140, %c0_141] : memref<8x128xf32, #tpu.memory_space<vmem>>, vector<8x128xf32>
      tpu.vector_store %arg6[%c0_140, %c0_141], %353 {strides = array<i32>} : memref<8x128xf32, #tpu.memory_space<vmem>>, vector<8x128xf32>,
    } else {
    }
    %c0 = arith.constant 0 : index
    %c0_1 = arith.constant 0 : index
    %3 = vector.load %arg5[%c0, %c0_1] : memref<8x128xf32, #tpu.memory_space<vmem>>, vector<8x128xf32>
    %c0_2 = arith.constant 0 : index
    %c0_3 = arith.constant 0 : index
    %4 = vector.load %arg6[%c0_2, %c0_3] : memref<8x128xf32, #tpu.memory_space<vmem>>, vector<8x128xf32>
    %c0_i32_4 = arith.constant 0 : i32
    %5 = arith.index_cast %c0_i32_4 : i32 to index
    %c0_5 = arith.constant 0 : index
    %c0_6 = arith.constant 0 : index
    %6 = vector.load %arg2[%5, %c0_5, %c0_6] : memref<8x8x512xbf16, #tpu.memory_space<vmem>>, vector<1x8x512xbf16>
    %7 = vector.shape_cast %6 : vector<1x8x512xbf16> to vector<8x512xbf16>
    %8 = arith.extf %7 : vector<8x512xbf16> to vector<8x512xf32>
    %9 = arith.truncf %3 : vector<8x128xf32> to vector<8x128xbf16>
    %c0_7 = arith.constant 0 : index
    %c0_8 = arith.constant 0 : index
    %10 = vector.load %arg3[%c0_7, %c0_8] : memref<128x512xbf16, #tpu.memory_space<vmem>>, vector<128x512xbf16>
    %cst = arith.constant dense<0.000000e+00> : vector<8x512xf32>
    %11 = tpu.matmul %9, %10, %cst {dimension_numbers = #tpu.dot_dimension_numbers<[1], [0], [0], [1], [0, 0, 1, 1], [], []>} : vector<8x128xbf16>, vector<128x512xbf16>, vector<8x512xf32> -> vector<8x512xf32>
    %12 = arith.addf %8, %11 : vector<8x512xf32>
    %13 = vector.extract_strided_slice %12 {offsets = [0, 0], sizes = [8, 128], strides = [1, 1]} : vector<8x512xf32> to vector<8x128xf32>
    %cst_9 = arith.constant 5.000000e-01 : f32
    %14 = vector.broadcast %cst_9 : f32 to vector<8x128xf32>
    %15 = arith.mulf %14, %13 : vector<8x128xf32>
    %16 = math.tanh %15 : vector<8x128xf32>
    %cst_10 = arith.constant 1.000000e+00 : f32
    %17 = vector.broadcast %cst_10 : f32 to vector<8x128xf32>
    %18 = arith.addf %16, %17 : vector<8x128xf32>
    %cst_11 = arith.constant 5.000000e-01 : f32
    %19 = vector.broadcast %cst_11 : f32 to vector<8x128xf32>
    %20 = arith.mulf %19, %18 : vector<8x128xf32>
    %21 = vector.extract_strided_slice %12 {offsets = [0, 128], sizes = [8, 128], strides = [1, 1]} : vector<8x512xf32> to vector<8x128xf32>
    %cst_12 = arith.constant 5.000000e-01 : f32
    %22 = vector.broadcast %cst_12 : f32 to vector<8x128xf32>
    %23 = arith.mulf %22, %21 : vector<8x128xf32>
    %24 = math.tanh %23 : vector<8x128xf32>
    %cst_13 = arith.constant 1.000000e+00 : f32
    %25 = vector.broadcast %cst_13 : f32 to vector<8x128xf32>
    %26 = arith.addf %24, %25 : vector<8x128xf32>
    %cst_14 = arith.constant 5.000000e-01 : f32
    %27 = vector.broadcast %cst_14 : f32 to vector<8x128xf32>
    %28 = arith.mulf %27, %26 : vector<8x128xf32>
    %29 = vector.extract_strided_slice %12 {offsets = [0, 256], sizes = [8, 128], strides = [1, 1]} : vector<8x512xf32> to vector<8x128xf32>
    %30 = math.tanh %29 : vector<8x128xf32>
    %31 = vector.extract_strided_slice %12 {offsets = [0, 384], sizes = [8, 128], strides = [1, 1]} : vector<8x512xf32> to vector<8x128xf32>
    %cst_15 = arith.constant 5.000000e-01 : f32
    %32 = vector.broadcast %cst_15 : f32 to vector<8x128xf32>
    %33 = arith.mulf %32, %31 : vector<8x128xf32>
    %34 = math.tanh %33 : vector<8x128xf32>
    %cst_16 = arith.constant 1.000000e+00 : f32
    %35 = vector.broadcast %cst_16 : f32 to vector<8x128xf32>
    %36 = arith.addf %34, %35 : vector<8x128xf32>
    %cst_17 = arith.constant 5.000000e-01 : f32
    %37 = vector.broadcast %cst_17 : f32 to vector<8x128xf32>
    %38 = arith.mulf %37, %36 : vector<8x128xf32>
    %39 = arith.mulf %28, %4 : vector<8x128xf32>
    %40 = arith.mulf %20, %30 : vector<8x128xf32>
    %41 = arith.addf %39, %40 : vector<8x128xf32>
    %42 = math.tanh %41 : vector<8x128xf32>
    %43 = arith.mulf %38, %42 : vector<8x128xf32>
    %44 = arith.index_cast %c0_i32_4 : i32 to index
    %c0_18 = arith.constant 0 : index
    %c0_19 = arith.constant 0 : index
    %45 = vector.load %arg4[%44, %c0_18, %c0_19] : memref<8x8x128xf32, #tpu.memory_space<vmem>>, vector<1x8x128xf32>
    %46 = vector.shape_cast %45 : vector<1x8x128xf32> to vector<8x128xf32>
    %47 = vector.shape_cast %43 : vector<8x128xf32> to vector<1x8x128xf32>
    tpu.vector_store %arg4[%44, %c0_18, %c0_19], %47 {strides = array<i32>} : memref<8x8x128xf32, #tpu.memory_space<vmem>>, vector<1x8x128xf32>,
    %c1_i32 = arith.constant 1 : i32
    %48 = arith.index_cast %c1_i32 : i32 to index
    %c0_20 = arith.constant 0 : index
    %c0_21 = arith.constant 0 : index
    %49 = vector.load %arg2[%48, %c0_20, %c0_21] : memref<8x8x512xbf16, #tpu.memory_space<vmem>>, vector<1x8x512xbf16>
    %50 = vector.shape_cast %49 : vector<1x8x512xbf16> to vector<8x512xbf16>
    %51 = arith.extf %50 : vector<8x512xbf16> to vector<8x512xf32>
    %52 = arith.truncf %43 : vector<8x128xf32> to vector<8x128xbf16>
    %c0_22 = arith.constant 0 : index
    %c0_23 = arith.constant 0 : index
    %53 = vector.load %arg3[%c0_22, %c0_23] : memref<128x512xbf16, #tpu.memory_space<vmem>>, vector<128x512xbf16>
    %cst_24 = arith.constant dense<0.000000e+00> : vector<8x512xf32>
    %54 = tpu.matmul %52, %53, %cst_24 {dimension_numbers = #tpu.dot_dimension_numbers<[1], [0], [0], [1], [0, 0, 1, 1], [], []>} : vector<8x128xbf16>, vector<128x512xbf16>, vector<8x512xf32> -> vector<8x512xf32>
    %55 = arith.addf %51, %54 : vector<8x512xf32>
    %56 = vector.extract_strided_slice %55 {offsets = [0, 0], sizes = [8, 128], strides = [1, 1]} : vector<8x512xf32> to vector<8x128xf32>
    %cst_25 = arith.constant 5.000000e-01 : f32
    %57 = vector.broadcast %cst_25 : f32 to vector<8x128xf32>
    %58 = arith.mulf %57, %56 : vector<8x128xf32>
    %59 = math.tanh %58 : vector<8x128xf32>
    %cst_26 = arith.constant 1.000000e+00 : f32
    %60 = vector.broadcast %cst_26 : f32 to vector<8x128xf32>
    %61 = arith.addf %59, %60 : vector<8x128xf32>
    %cst_27 = arith.constant 5.000000e-01 : f32
    %62 = vector.broadcast %cst_27 : f32 to vector<8x128xf32>
    %63 = arith.mulf %62, %61 : vector<8x128xf32>
    %64 = vector.extract_strided_slice %55 {offsets = [0, 128], sizes = [8, 128], strides = [1, 1]} : vector<8x512xf32> to vector<8x128xf32>
    %cst_28 = arith.constant 5.000000e-01 : f32
    %65 = vector.broadcast %cst_28 : f32 to vector<8x128xf32>
    %66 = arith.mulf %65, %64 : vector<8x128xf32>
    %67 = math.tanh %66 : vector<8x128xf32>
    %cst_29 = arith.constant 1.000000e+00 : f32
    %68 = vector.broadcast %cst_29 : f32 to vector<8x128xf32>
    %69 = arith.addf %67, %68 : vector<8x128xf32>
    %cst_30 = arith.constant 5.000000e-01 : f32
    %70 = vector.broadcast %cst_30 : f32 to vector<8x128xf32>
    %71 = arith.mulf %70, %69 : vector<8x128xf32>
    %72 = vector.extract_strided_slice %55 {offsets = [0, 256], sizes = [8, 128], strides = [1, 1]} : vector<8x512xf32> to vector<8x128xf32>
    %73 = math.tanh %72 : vector<8x128xf32>
    %74 = vector.extract_strided_slice %55 {offsets = [0, 384], sizes = [8, 128], strides = [1, 1]} : vector<8x512xf32> to vector<8x128xf32>
    %cst_31 = arith.constant 5.000000e-01 : f32
    %75 = vector.broadcast %cst_31 : f32 to vector<8x128xf32>
    %76 = arith.mulf %75, %74 : vector<8x128xf32>
    %77 = math.tanh %76 : vector<8x128xf32>
    %cst_32 = arith.constant 1.000000e+00 : f32
    %78 = vector.broadcast %cst_32 : f32 to vector<8x128xf32>
    %79 = arith.addf %77, %78 : vector<8x128xf32>
    %cst_33 = arith.constant 5.000000e-01 : f32
    %80 = vector.broadcast %cst_33 : f32 to vector<8x128xf32>
    %81 = arith.mulf %80, %79 : vector<8x128xf32>
    %82 = arith.mulf %71, %41 : vector<8x128xf32>
    %83 = arith.mulf %63, %73 : vector<8x128xf32>
    %84 = arith.addf %82, %83 : vector<8x128xf32>
    %85 = math.tanh %84 : vector<8x128xf32>
    %86 = arith.mulf %81, %85 : vector<8x128xf32>
    %87 = arith.index_cast %c1_i32 : i32 to index
    %c0_34 = arith.constant 0 : index
    %c0_35 = arith.constant 0 : index
    %88 = vector.load %arg4[%87, %c0_34, %c0_35] : memref<8x8x128xf32, #tpu.memory_space<vmem>>, vector<1x8x128xf32>
    %89 = vector.shape_cast %88 : vector<1x8x128xf32> to vector<8x128xf32>
    %90 = vector.shape_cast %86 : vector<8x128xf32> to vector<1x8x128xf32>
    tpu.vector_store %arg4[%87, %c0_34, %c0_35], %90 {strides = array<i32>} : memref<8x8x128xf32, #tpu.memory_space<vmem>>, vector<1x8x128xf32>,
    %c2_i32 = arith.constant 2 : i32
    %91 = arith.index_cast %c2_i32 : i32 to index
    %c0_36 = arith.constant 0 : index
    %c0_37 = arith.constant 0 : index
    %92 = vector.load %arg2[%91, %c0_36, %c0_37] : memref<8x8x512xbf16, #tpu.memory_space<vmem>>, vector<1x8x512xbf16>
    %93 = vector.shape_cast %92 : vector<1x8x512xbf16> to vector<8x512xbf16>
    %94 = arith.extf %93 : vector<8x512xbf16> to vector<8x512xf32>
    %95 = arith.truncf %86 : vector<8x128xf32> to vector<8x128xbf16>
    %c0_38 = arith.constant 0 : index
    %c0_39 = arith.constant 0 : index
    %96 = vector.load %arg3[%c0_38, %c0_39] : memref<128x512xbf16, #tpu.memory_space<vmem>>, vector<128x512xbf16>
    %cst_40 = arith.constant dense<0.000000e+00> : vector<8x512xf32>
    %97 = tpu.matmul %95, %96, %cst_40 {dimension_numbers = #tpu.dot_dimension_numbers<[1], [0], [0], [1], [0, 0, 1, 1], [], []>} : vector<8x128xbf16>, vector<128x512xbf16>, vector<8x512xf32> -> vector<8x512xf32>
    %98 = arith.addf %94, %97 : vector<8x512xf32>
    %99 = vector.extract_strided_slice %98 {offsets = [0, 0], sizes = [8, 128], strides = [1, 1]} : vector<8x512xf32> to vector<8x128xf32>
    %cst_41 = arith.constant 5.000000e-01 : f32
    %100 = vector.broadcast %cst_41 : f32 to vector<8x128xf32>
    %101 = arith.mulf %100, %99 : vector<8x128xf32>
    %102 = math.tanh %101 : vector<8x128xf32>
    %cst_42 = arith.constant 1.000000e+00 : f32
    %103 = vector.broadcast %cst_42 : f32 to vector<8x128xf32>
    %104 = arith.addf %102, %103 : vector<8x128xf32>
    %cst_43 = arith.constant 5.000000e-01 : f32
    %105 = vector.broadcast %cst_43 : f32 to vector<8x128xf32>
    %106 = arith.mulf %105, %104 : vector<8x128xf32>
    %107 = vector.extract_strided_slice %98 {offsets = [0, 128], sizes = [8, 128], strides = [1, 1]} : vector<8x512xf32> to vector<8x128xf32>
    %cst_44 = arith.constant 5.000000e-01 : f32
    %108 = vector.broadcast %cst_44 : f32 to vector<8x128xf32>
    %109 = arith.mulf %108, %107 : vector<8x128xf32>
    %110 = math.tanh %109 : vector<8x128xf32>
    %cst_45 = arith.constant 1.000000e+00 : f32
    %111 = vector.broadcast %cst_45 : f32 to vector<8x128xf32>
    %112 = arith.addf %110, %111 : vector<8x128xf32>
    %cst_46 = arith.constant 5.000000e-01 : f32
    %113 = vector.broadcast %cst_46 : f32 to vector<8x128xf32>
    %114 = arith.mulf %113, %112 : vector<8x128xf32>
    %115 = vector.extract_strided_slice %98 {offsets = [0, 256], sizes = [8, 128], strides = [1, 1]} : vector<8x512xf32> to vector<8x128xf32>
    %116 = math.tanh %115 : vector<8x128xf32>
    %117 = vector.extract_strided_slice %98 {offsets = [0, 384], sizes = [8, 128], strides = [1, 1]} : vector<8x512xf32> to vector<8x128xf32>
    %cst_47 = arith.constant 5.000000e-01 : f32
    %118 = vector.broadcast %cst_47 : f32 to vector<8x128xf32>
    %119 = arith.mulf %118, %117 : vector<8x128xf32>
    %120 = math.tanh %119 : vector<8x128xf32>
    %cst_48 = arith.constant 1.000000e+00 : f32
    %121 = vector.broadcast %cst_48 : f32 to vector<8x128xf32>
    %122 = arith.addf %120, %121 : vector<8x128xf32>
    %cst_49 = arith.constant 5.000000e-01 : f32
    %123 = vector.broadcast %cst_49 : f32 to vector<8x128xf32>
    %124 = arith.mulf %123, %122 : vector<8x128xf32>
    %125 = arith.mulf %114, %84 : vector<8x128xf32>
    %126 = arith.mulf %106, %116 : vector<8x128xf32>
    %127 = arith.addf %125, %126 : vector<8x128xf32>
    %128 = math.tanh %127 : vector<8x128xf32>
    %129 = arith.mulf %124, %128 : vector<8x128xf32>
    %130 = arith.index_cast %c2_i32 : i32 to index
    %c0_50 = arith.constant 0 : index
    %c0_51 = arith.constant 0 : index
    %131 = vector.load %arg4[%130, %c0_50, %c0_51] : memref<8x8x128xf32, #tpu.memory_space<vmem>>, vector<1x8x128xf32>
    %132 = vector.shape_cast %131 : vector<1x8x128xf32> to vector<8x128xf32>
    %133 = vector.shape_cast %129 : vector<8x128xf32> to vector<1x8x128xf32>
    tpu.vector_store %arg4[%130, %c0_50, %c0_51], %133 {strides = array<i32>} : memref<8x8x128xf32, #tpu.memory_space<vmem>>, vector<1x8x128xf32>,
    %c3_i32 = arith.constant 3 : i32
    %134 = arith.index_cast %c3_i32 : i32 to index
    %c0_52 = arith.constant 0 : index
    %c0_53 = arith.constant 0 : index
    %135 = vector.load %arg2[%134, %c0_52, %c0_53] : memref<8x8x512xbf16, #tpu.memory_space<vmem>>, vector<1x8x512xbf16>
    %136 = vector.shape_cast %135 : vector<1x8x512xbf16> to vector<8x512xbf16>
    %137 = arith.extf %136 : vector<8x512xbf16> to vector<8x512xf32>
    %138 = arith.truncf %129 : vector<8x128xf32> to vector<8x128xbf16>
    %c0_54 = arith.constant 0 : index
    %c0_55 = arith.constant 0 : index
    %139 = vector.load %arg3[%c0_54, %c0_55] : memref<128x512xbf16, #tpu.memory_space<vmem>>, vector<128x512xbf16>
    %cst_56 = arith.constant dense<0.000000e+00> : vector<8x512xf32>
    %140 = tpu.matmul %138, %139, %cst_56 {dimension_numbers = #tpu.dot_dimension_numbers<[1], [0], [0], [1], [0, 0, 1, 1], [], []>} : vector<8x128xbf16>, vector<128x512xbf16>, vector<8x512xf32> -> vector<8x512xf32>
    %141 = arith.addf %137, %140 : vector<8x512xf32>
    %142 = vector.extract_strided_slice %141 {offsets = [0, 0], sizes = [8, 128], strides = [1, 1]} : vector<8x512xf32> to vector<8x128xf32>
    %cst_57 = arith.constant 5.000000e-01 : f32
    %143 = vector.broadcast %cst_57 : f32 to vector<8x128xf32>
    %144 = arith.mulf %143, %142 : vector<8x128xf32>
    %145 = math.tanh %144 : vector<8x128xf32>
    %cst_58 = arith.constant 1.000000e+00 : f32
    %146 = vector.broadcast %cst_58 : f32 to vector<8x128xf32>
    %147 = arith.addf %145, %146 : vector<8x128xf32>
    %cst_59 = arith.constant 5.000000e-01 : f32
    %148 = vector.broadcast %cst_59 : f32 to vector<8x128xf32>
    %149 = arith.mulf %148, %147 : vector<8x128xf32>
    %150 = vector.extract_strided_slice %141 {offsets = [0, 128], sizes = [8, 128], strides = [1, 1]} : vector<8x512xf32> to vector<8x128xf32>
    %cst_60 = arith.constant 5.000000e-01 : f32
    %151 = vector.broadcast %cst_60 : f32 to vector<8x128xf32>
    %152 = arith.mulf %151, %150 : vector<8x128xf32>
    %153 = math.tanh %152 : vector<8x128xf32>
    %cst_61 = arith.constant 1.000000e+00 : f32
    %154 = vector.broadcast %cst_61 : f32 to vector<8x128xf32>
    %155 = arith.addf %153, %154 : vector<8x128xf32>
    %cst_62 = arith.constant 5.000000e-01 : f32
    %156 = vector.broadcast %cst_62 : f32 to vector<8x128xf32>
    %157 = arith.mulf %156, %155 : vector<8x128xf32>
    %158 = vector.extract_strided_slice %141 {offsets = [0, 256], sizes = [8, 128], strides = [1, 1]} : vector<8x512xf32> to vector<8x128xf32>
    %159 = math.tanh %158 : vector<8x128xf32>
    %160 = vector.extract_strided_slice %141 {offsets = [0, 384], sizes = [8, 128], strides = [1, 1]} : vector<8x512xf32> to vector<8x128xf32>
    %cst_63 = arith.constant 5.000000e-01 : f32
    %161 = vector.broadcast %cst_63 : f32 to vector<8x128xf32>
    %162 = arith.mulf %161, %160 : vector<8x128xf32>
    %163 = math.tanh %162 : vector<8x128xf32>
    %cst_64 = arith.constant 1.000000e+00 : f32
    %164 = vector.broadcast %cst_64 : f32 to vector<8x128xf32>
    %165 = arith.addf %163, %164 : vector<8x128xf32>
    %cst_65 = arith.constant 5.000000e-01 : f32
    %166 = vector.broadcast %cst_65 : f32 to vector<8x128xf32>
    %167 = arith.mulf %166, %165 : vector<8x128xf32>
    %168 = arith.mulf %157, %127 : vector<8x128xf32>
    %169 = arith.mulf %149, %159 : vector<8x128xf32>
    %170 = arith.addf %168, %169 : vector<8x128xf32>
    %171 = math.tanh %170 : vector<8x128xf32>
    %172 = arith.mulf %167, %171 : vector<8x128xf32>
    %173 = arith.index_cast %c3_i32 : i32 to index
    %c0_66 = arith.constant 0 : index
    %c0_67 = arith.constant 0 : index
    %174 = vector.load %arg4[%173, %c0_66, %c0_67] : memref<8x8x128xf32, #tpu.memory_space<vmem>>, vector<1x8x128xf32>
    %175 = vector.shape_cast %174 : vector<1x8x128xf32> to vector<8x128xf32>
    %176 = vector.shape_cast %172 : vector<8x128xf32> to vector<1x8x128xf32>
    tpu.vector_store %arg4[%173, %c0_66, %c0_67], %176 {strides = array<i32>} : memref<8x8x128xf32, #tpu.memory_space<vmem>>, vector<1x8x128xf32>,
    %c4_i32 = arith.constant 4 : i32
    %177 = arith.index_cast %c4_i32 : i32 to index
    %c0_68 = arith.constant 0 : index
    %c0_69 = arith.constant 0 : index
    %178 = vector.load %arg2[%177, %c0_68, %c0_69] : memref<8x8x512xbf16, #tpu.memory_space<vmem>>, vector<1x8x512xbf16>
    %179 = vector.shape_cast %178 : vector<1x8x512xbf16> to vector<8x512xbf16>
    %180 = arith.extf %179 : vector<8x512xbf16> to vector<8x512xf32>
    %181 = arith.truncf %172 : vector<8x128xf32> to vector<8x128xbf16>
    %c0_70 = arith.constant 0 : index
    %c0_71 = arith.constant 0 : index
    %182 = vector.load %arg3[%c0_70, %c0_71] : memref<128x512xbf16, #tpu.memory_space<vmem>>, vector<128x512xbf16>
    %cst_72 = arith.constant dense<0.000000e+00> : vector<8x512xf32>
    %183 = tpu.matmul %181, %182, %cst_72 {dimension_numbers = #tpu.dot_dimension_numbers<[1], [0], [0], [1], [0, 0, 1, 1], [], []>} : vector<8x128xbf16>, vector<128x512xbf16>, vector<8x512xf32> -> vector<8x512xf32>
    %184 = arith.addf %180, %183 : vector<8x512xf32>
    %185 = vector.extract_strided_slice %184 {offsets = [0, 0], sizes = [8, 128], strides = [1, 1]} : vector<8x512xf32> to vector<8x128xf32>
    %cst_73 = arith.constant 5.000000e-01 : f32
    %186 = vector.broadcast %cst_73 : f32 to vector<8x128xf32>
    %187 = arith.mulf %186, %185 : vector<8x128xf32>
    %188 = math.tanh %187 : vector<8x128xf32>
    %cst_74 = arith.constant 1.000000e+00 : f32
    %189 = vector.broadcast %cst_74 : f32 to vector<8x128xf32>
    %190 = arith.addf %188, %189 : vector<8x128xf32>
    %cst_75 = arith.constant 5.000000e-01 : f32
    %191 = vector.broadcast %cst_75 : f32 to vector<8x128xf32>
    %192 = arith.mulf %191, %190 : vector<8x128xf32>
    %193 = vector.extract_strided_slice %184 {offsets = [0, 128], sizes = [8, 128], strides = [1, 1]} : vector<8x512xf32> to vector<8x128xf32>
    %cst_76 = arith.constant 5.000000e-01 : f32
    %194 = vector.broadcast %cst_76 : f32 to vector<8x128xf32>
    %195 = arith.mulf %194, %193 : vector<8x128xf32>
    %196 = math.tanh %195 : vector<8x128xf32>
    %cst_77 = arith.constant 1.000000e+00 : f32
    %197 = vector.broadcast %cst_77 : f32 to vector<8x128xf32>
    %198 = arith.addf %196, %197 : vector<8x128xf32>
    %cst_78 = arith.constant 5.000000e-01 : f32
    %199 = vector.broadcast %cst_78 : f32 to vector<8x128xf32>
    %200 = arith.mulf %199, %198 : vector<8x128xf32>
    %201 = vector.extract_strided_slice %184 {offsets = [0, 256], sizes = [8, 128], strides = [1, 1]} : vector<8x512xf32> to vector<8x128xf32>
    %202 = math.tanh %201 : vector<8x128xf32>
    %203 = vector.extract_strided_slice %184 {offsets = [0, 384], sizes = [8, 128], strides = [1, 1]} : vector<8x512xf32> to vector<8x128xf32>
    %cst_79 = arith.constant 5.000000e-01 : f32
    %204 = vector.broadcast %cst_79 : f32 to vector<8x128xf32>
    %205 = arith.mulf %204, %203 : vector<8x128xf32>
    %206 = math.tanh %205 : vector<8x128xf32>
    %cst_80 = arith.constant 1.000000e+00 : f32
    %207 = vector.broadcast %cst_80 : f32 to vector<8x128xf32>
    %208 = arith.addf %206, %207 : vector<8x128xf32>
    %cst_81 = arith.constant 5.000000e-01 : f32
    %209 = vector.broadcast %cst_81 : f32 to vector<8x128xf32>
    %210 = arith.mulf %209, %208 : vector<8x128xf32>
    %211 = arith.mulf %200, %170 : vector<8x128xf32>
    %212 = arith.mulf %192, %202 : vector<8x128xf32>
    %213 = arith.addf %211, %212 : vector<8x128xf32>
    %214 = math.tanh %213 : vector<8x128xf32>
    %215 = arith.mulf %210, %214 : vector<8x128xf32>
    %216 = arith.index_cast %c4_i32 : i32 to index
    %c0_82 = arith.constant 0 : index
    %c0_83 = arith.constant 0 : index
    %217 = vector.load %arg4[%216, %c0_82, %c0_83] : memref<8x8x128xf32, #tpu.memory_space<vmem>>, vector<1x8x128xf32>
    %218 = vector.shape_cast %217 : vector<1x8x128xf32> to vector<8x128xf32>
    %219 = vector.shape_cast %215 : vector<8x128xf32> to vector<1x8x128xf32>
    tpu.vector_store %arg4[%216, %c0_82, %c0_83], %219 {strides = array<i32>} : memref<8x8x128xf32, #tpu.memory_space<vmem>>, vector<1x8x128xf32>,
    %c5_i32 = arith.constant 5 : i32
    %220 = arith.index_cast %c5_i32 : i32 to index
    %c0_84 = arith.constant 0 : index
    %c0_85 = arith.constant 0 : index
    %221 = vector.load %arg2[%220, %c0_84, %c0_85] : memref<8x8x512xbf16, #tpu.memory_space<vmem>>, vector<1x8x512xbf16>
    %222 = vector.shape_cast %221 : vector<1x8x512xbf16> to vector<8x512xbf16>
    %223 = arith.extf %222 : vector<8x512xbf16> to vector<8x512xf32>
    %224 = arith.truncf %215 : vector<8x128xf32> to vector<8x128xbf16>
    %c0_86 = arith.constant 0 : index
    %c0_87 = arith.constant 0 : index
    %225 = vector.load %arg3[%c0_86, %c0_87] : memref<128x512xbf16, #tpu.memory_space<vmem>>, vector<128x512xbf16>
    %cst_88 = arith.constant dense<0.000000e+00> : vector<8x512xf32>
    %226 = tpu.matmul %224, %225, %cst_88 {dimension_numbers = #tpu.dot_dimension_numbers<[1], [0], [0], [1], [0, 0, 1, 1], [], []>} : vector<8x128xbf16>, vector<128x512xbf16>, vector<8x512xf32> -> vector<8x512xf32>
    %227 = arith.addf %223, %226 : vector<8x512xf32>
    %228 = vector.extract_strided_slice %227 {offsets = [0, 0], sizes = [8, 128], strides = [1, 1]} : vector<8x512xf32> to vector<8x128xf32>
    %cst_89 = arith.constant 5.000000e-01 : f32
    %229 = vector.broadcast %cst_89 : f32 to vector<8x128xf32>
    %230 = arith.mulf %229, %228 : vector<8x128xf32>
    %231 = math.tanh %230 : vector<8x128xf32>
    %cst_90 = arith.constant 1.000000e+00 : f32
    %232 = vector.broadcast %cst_90 : f32 to vector<8x128xf32>
    %233 = arith.addf %231, %232 : vector<8x128xf32>
    %cst_91 = arith.constant 5.000000e-01 : f32
    %234 = vector.broadcast %cst_91 : f32 to vector<8x128xf32>
    %235 = arith.mulf %234, %233 : vector<8x128xf32>
    %236 = vector.extract_strided_slice %227 {offsets = [0, 128], sizes = [8, 128], strides = [1, 1]} : vector<8x512xf32> to vector<8x128xf32>
    %cst_92 = arith.constant 5.000000e-01 : f32
    %237 = vector.broadcast %cst_92 : f32 to vector<8x128xf32>
    %238 = arith.mulf %237, %236 : vector<8x128xf32>
    %239 = math.tanh %238 : vector<8x128xf32>
    %cst_93 = arith.constant 1.000000e+00 : f32
    %240 = vector.broadcast %cst_93 : f32 to vector<8x128xf32>
    %241 = arith.addf %239, %240 : vector<8x128xf32>
    %cst_94 = arith.constant 5.000000e-01 : f32
    %242 = vector.broadcast %cst_94 : f32 to vector<8x128xf32>
    %243 = arith.mulf %242, %241 : vector<8x128xf32>
    %244 = vector.extract_strided_slice %227 {offsets = [0, 256], sizes = [8, 128], strides = [1, 1]} : vector<8x512xf32> to vector<8x128xf32>
    %245 = math.tanh %244 : vector<8x128xf32>
    %246 = vector.extract_strided_slice %227 {offsets = [0, 384], sizes = [8, 128], strides = [1, 1]} : vector<8x512xf32> to vector<8x128xf32>
    %cst_95 = arith.constant 5.000000e-01 : f32
    %247 = vector.broadcast %cst_95 : f32 to vector<8x128xf32>
    %248 = arith.mulf %247, %246 : vector<8x128xf32>
    %249 = math.tanh %248 : vector<8x128xf32>
    %cst_96 = arith.constant 1.000000e+00 : f32
    %250 = vector.broadcast %cst_96 : f32 to vector<8x128xf32>
    %251 = arith.addf %249, %250 : vector<8x128xf32>
    %cst_97 = arith.constant 5.000000e-01 : f32
    %252 = vector.broadcast %cst_97 : f32 to vector<8x128xf32>
    %253 = arith.mulf %252, %251 : vector<8x128xf32>
    %254 = arith.mulf %243, %213 : vector<8x128xf32>
    %255 = arith.mulf %235, %245 : vector<8x128xf32>
    %256 = arith.addf %254, %255 : vector<8x128xf32>
    %257 = math.tanh %256 : vector<8x128xf32>
    %258 = arith.mulf %253, %257 : vector<8x128xf32>
    %259 = arith.index_cast %c5_i32 : i32 to index
    %c0_98 = arith.constant 0 : index
    %c0_99 = arith.constant 0 : index
    %260 = vector.load %arg4[%259, %c0_98, %c0_99] : memref<8x8x128xf32, #tpu.memory_space<vmem>>, vector<1x8x128xf32>
    %261 = vector.shape_cast %260 : vector<1x8x128xf32> to vector<8x128xf32>
    %262 = vector.shape_cast %258 : vector<8x128xf32> to vector<1x8x128xf32>
    tpu.vector_store %arg4[%259, %c0_98, %c0_99], %262 {strides = array<i32>} : memref<8x8x128xf32, #tpu.memory_space<vmem>>, vector<1x8x128xf32>,
    %c6_i32 = arith.constant 6 : i32
    %263 = arith.index_cast %c6_i32 : i32 to index
    %c0_100 = arith.constant 0 : index
    %c0_101 = arith.constant 0 : index
    %264 = vector.load %arg2[%263, %c0_100, %c0_101] : memref<8x8x512xbf16, #tpu.memory_space<vmem>>, vector<1x8x512xbf16>
    %265 = vector.shape_cast %264 : vector<1x8x512xbf16> to vector<8x512xbf16>
    %266 = arith.extf %265 : vector<8x512xbf16> to vector<8x512xf32>
    %267 = arith.truncf %258 : vector<8x128xf32> to vector<8x128xbf16>
    %c0_102 = arith.constant 0 : index
    %c0_103 = arith.constant 0 : index
    %268 = vector.load %arg3[%c0_102, %c0_103] : memref<128x512xbf16, #tpu.memory_space<vmem>>, vector<128x512xbf16>
    %cst_104 = arith.constant dense<0.000000e+00> : vector<8x512xf32>
    %269 = tpu.matmul %267, %268, %cst_104 {dimension_numbers = #tpu.dot_dimension_numbers<[1], [0], [0], [1], [0, 0, 1, 1], [], []>} : vector<8x128xbf16>, vector<128x512xbf16>, vector<8x512xf32> -> vector<8x512xf32>
    %270 = arith.addf %266, %269 : vector<8x512xf32>
    %271 = vector.extract_strided_slice %270 {offsets = [0, 0], sizes = [8, 128], strides = [1, 1]} : vector<8x512xf32> to vector<8x128xf32>
    %cst_105 = arith.constant 5.000000e-01 : f32
    %272 = vector.broadcast %cst_105 : f32 to vector<8x128xf32>
    %273 = arith.mulf %272, %271 : vector<8x128xf32>
    %274 = math.tanh %273 : vector<8x128xf32>
    %cst_106 = arith.constant 1.000000e+00 : f32
    %275 = vector.broadcast %cst_106 : f32 to vector<8x128xf32>
    %276 = arith.addf %274, %275 : vector<8x128xf32>
    %cst_107 = arith.constant 5.000000e-01 : f32
    %277 = vector.broadcast %cst_107 : f32 to vector<8x128xf32>
    %278 = arith.mulf %277, %276 : vector<8x128xf32>
    %279 = vector.extract_strided_slice %270 {offsets = [0, 128], sizes = [8, 128], strides = [1, 1]} : vector<8x512xf32> to vector<8x128xf32>
    %cst_108 = arith.constant 5.000000e-01 : f32
    %280 = vector.broadcast %cst_108 : f32 to vector<8x128xf32>
    %281 = arith.mulf %280, %279 : vector<8x128xf32>
    %282 = math.tanh %281 : vector<8x128xf32>
    %cst_109 = arith.constant 1.000000e+00 : f32
    %283 = vector.broadcast %cst_109 : f32 to vector<8x128xf32>
    %284 = arith.addf %282, %283 : vector<8x128xf32>
    %cst_110 = arith.constant 5.000000e-01 : f32
    %285 = vector.broadcast %cst_110 : f32 to vector<8x128xf32>
    %286 = arith.mulf %285, %284 : vector<8x128xf32>
    %287 = vector.extract_strided_slice %270 {offsets = [0, 256], sizes = [8, 128], strides = [1, 1]} : vector<8x512xf32> to vector<8x128xf32>
    %288 = math.tanh %287 : vector<8x128xf32>
    %289 = vector.extract_strided_slice %270 {offsets = [0, 384], sizes = [8, 128], strides = [1, 1]} : vector<8x512xf32> to vector<8x128xf32>
    %cst_111 = arith.constant 5.000000e-01 : f32
    %290 = vector.broadcast %cst_111 : f32 to vector<8x128xf32>
    %291 = arith.mulf %290, %289 : vector<8x128xf32>
    %292 = math.tanh %291 : vector<8x128xf32>
    %cst_112 = arith.constant 1.000000e+00 : f32
    %293 = vector.broadcast %cst_112 : f32 to vector<8x128xf32>
    %294 = arith.addf %292, %293 : vector<8x128xf32>
    %cst_113 = arith.constant 5.000000e-01 : f32
    %295 = vector.broadcast %cst_113 : f32 to vector<8x128xf32>
    %296 = arith.mulf %295, %294 : vector<8x128xf32>
    %297 = arith.mulf %286, %256 : vector<8x128xf32>
    %298 = arith.mulf %278, %288 : vector<8x128xf32>
    %299 = arith.addf %297, %298 : vector<8x128xf32>
    %300 = math.tanh %299 : vector<8x128xf32>
    %301 = arith.mulf %296, %300 : vector<8x128xf32>
    %302 = arith.index_cast %c6_i32 : i32 to index
    %c0_114 = arith.constant 0 : index
    %c0_115 = arith.constant 0 : index
    %303 = vector.load %arg4[%302, %c0_114, %c0_115] : memref<8x8x128xf32, #tpu.memory_space<vmem>>, vector<1x8x128xf32>
    %304 = vector.shape_cast %303 : vector<1x8x128xf32> to vector<8x128xf32>
    %305 = vector.shape_cast %301 : vector<8x128xf32> to vector<1x8x128xf32>
    tpu.vector_store %arg4[%302, %c0_114, %c0_115], %305 {strides = array<i32>} : memref<8x8x128xf32, #tpu.memory_space<vmem>>, vector<1x8x128xf32>,
    %c7_i32 = arith.constant 7 : i32
    %306 = arith.index_cast %c7_i32 : i32 to index
    %c0_116 = arith.constant 0 : index
    %c0_117 = arith.constant 0 : index
    %307 = vector.load %arg2[%306, %c0_116, %c0_117] : memref<8x8x512xbf16, #tpu.memory_space<vmem>>, vector<1x8x512xbf16>
    %308 = vector.shape_cast %307 : vector<1x8x512xbf16> to vector<8x512xbf16>
    %309 = arith.extf %308 : vector<8x512xbf16> to vector<8x512xf32>
    %310 = arith.truncf %301 : vector<8x128xf32> to vector<8x128xbf16>
    %c0_118 = arith.constant 0 : index
    %c0_119 = arith.constant 0 : index
    %311 = vector.load %arg3[%c0_118, %c0_119] : memref<128x512xbf16, #tpu.memory_space<vmem>>, vector<128x512xbf16>
    %cst_120 = arith.constant dense<0.000000e+00> : vector<8x512xf32>
    %312 = tpu.matmul %310, %311, %cst_120 {dimension_numbers = #tpu.dot_dimension_numbers<[1], [0], [0], [1], [0, 0, 1, 1], [], []>} : vector<8x128xbf16>, vector<128x512xbf16>, vector<8x512xf32> -> vector<8x512xf32>
    %313 = arith.addf %309, %312 : vector<8x512xf32>
    %314 = vector.extract_strided_slice %313 {offsets = [0, 0], sizes = [8, 128], strides = [1, 1]} : vector<8x512xf32> to vector<8x128xf32>
    %cst_121 = arith.constant 5.000000e-01 : f32
    %315 = vector.broadcast %cst_121 : f32 to vector<8x128xf32>
    %316 = arith.mulf %315, %314 : vector<8x128xf32>
    %317 = math.tanh %316 : vector<8x128xf32>
    %cst_122 = arith.constant 1.000000e+00 : f32
    %318 = vector.broadcast %cst_122 : f32 to vector<8x128xf32>
    %319 = arith.addf %317, %318 : vector<8x128xf32>
    %cst_123 = arith.constant 5.000000e-01 : f32
    %320 = vector.broadcast %cst_123 : f32 to vector<8x128xf32>
    %321 = arith.mulf %320, %319 : vector<8x128xf32>
    %322 = vector.extract_strided_slice %313 {offsets = [0, 128], sizes = [8, 128], strides = [1, 1]} : vector<8x512xf32> to vector<8x128xf32>
    %cst_124 = arith.constant 5.000000e-01 : f32
    %323 = vector.broadcast %cst_124 : f32 to vector<8x128xf32>
    %324 = arith.mulf %323, %322 : vector<8x128xf32>
    %325 = math.tanh %324 : vector<8x128xf32>
    %cst_125 = arith.constant 1.000000e+00 : f32
    %326 = vector.broadcast %cst_125 : f32 to vector<8x128xf32>
    %327 = arith.addf %325, %326 : vector<8x128xf32>
    %cst_126 = arith.constant 5.000000e-01 : f32
    %328 = vector.broadcast %cst_126 : f32 to vector<8x128xf32>
    %329 = arith.mulf %328, %327 : vector<8x128xf32>
    %330 = vector.extract_strided_slice %313 {offsets = [0, 256], sizes = [8, 128], strides = [1, 1]} : vector<8x512xf32> to vector<8x128xf32>
    %331 = math.tanh %330 : vector<8x128xf32>
    %332 = vector.extract_strided_slice %313 {offsets = [0, 384], sizes = [8, 128], strides = [1, 1]} : vector<8x512xf32> to vector<8x128xf32>
    %cst_127 = arith.constant 5.000000e-01 : f32
    %333 = vector.broadcast %cst_127 : f32 to vector<8x128xf32>
    %334 = arith.mulf %333, %332 : vector<8x128xf32>
    %335 = math.tanh %334 : vector<8x128xf32>
    %cst_128 = arith.constant 1.000000e+00 : f32
    %336 = vector.broadcast %cst_128 : f32 to vector<8x128xf32>
    %337 = arith.addf %335, %336 : vector<8x128xf32>
    %cst_129 = arith.constant 5.000000e-01 : f32
    %338 = vector.broadcast %cst_129 : f32 to vector<8x128xf32>
    %339 = arith.mulf %338, %337 : vector<8x128xf32>
    %340 = arith.mulf %329, %299 : vector<8x128xf32>
    %341 = arith.mulf %321, %331 : vector<8x128xf32>
    %342 = arith.addf %340, %341 : vector<8x128xf32>
    %343 = math.tanh %342 : vector<8x128xf32>
    %344 = arith.mulf %339, %343 : vector<8x128xf32>
    %345 = arith.index_cast %c7_i32 : i32 to index
    %c0_130 = arith.constant 0 : index
    %c0_131 = arith.constant 0 : index
    %346 = vector.load %arg4[%345, %c0_130, %c0_131] : memref<8x8x128xf32, #tpu.memory_space<vmem>>, vector<1x8x128xf32>
    %347 = vector.shape_cast %346 : vector<1x8x128xf32> to vector<8x128xf32>
    %348 = vector.shape_cast %344 : vector<8x128xf32> to vector<1x8x128xf32>
    tpu.vector_store %arg4[%345, %c0_130, %c0_131], %348 {strides = array<i32>} : memref<8x8x128xf32, #tpu.memory_space<vmem>>, vector<1x8x128xf32>,
    %c8_i32 = arith.constant 8 : i32
    %c0_132 = arith.constant 0 : index
    %c0_133 = arith.constant 0 : index
    %349 = vector.load %arg5[%c0_132, %c0_133] : memref<8x128xf32, #tpu.memory_space<vmem>>, vector<8x128xf32>
    tpu.vector_store %arg5[%c0_132, %c0_133], %344 {strides = array<i32>} : memref<8x128xf32, #tpu.memory_space<vmem>>, vector<8x128xf32>,
    %c0_134 = arith.constant 0 : index
    %c0_135 = arith.constant 0 : index
    %350 = vector.load %arg6[%c0_134, %c0_135] : memref<8x128xf32, #tpu.memory_space<vmem>>, vector<8x128xf32>
    tpu.vector_store %arg6[%c0_134, %c0_135], %342 {strides = array<i32>} : memref<8x128xf32, #tpu.memory_space<vmem>>, vector<8x128xf32>,
    return
  }
  func.func @transform_0(%arg0: i32, %arg1: i32) -> (i32, i32, i32) {
    %c0_i32 = arith.constant 0 : i32
    %c0_i32_0 = arith.constant 0 : i32
    return %arg1, %arg0, %c0_i32 : i32, i32, i32
  }
  func.func @transform_1(%arg0: i32, %arg1: i32) -> (i32, i32) {
    %c0_i32 = arith.constant 0 : i32
    %c0_i32_0 = arith.constant 0 : i32
    %c0_i32_1 = arith.constant 0 : i32
    return %c0_i32, %c0_i32_0 : i32, i32
  }
  func.func @transform_2(%arg0: i32, %arg1: i32) -> (i32, i32, i32) {
    %c0_i32 = arith.constant 0 : i32
    %c0_i32_0 = arith.constant 0 : i32
    return %arg1, %arg0, %c0_i32 : i32, i32, i32
  }
}

</mosaic_0001>

<llo_original>
// kernel: tpu_custom_call.1
$region0: #{tpu_custom_call.1}
  #allocation0 [shape = 'u32[]', space=smem, size = 0x4, offset = 0x4, fixed_abs, tag = 'smem constant byte address 0x4 - core index']
  #allocation1 [shape = 'u32[144,128]{1,0:T(1,128)}', space=vmem, size = 0x12000, scoped, tag = 'internal scratch']
  #allocation2 [shape = 'f32[8,128]{1,0:T(8,128)}', space=vmem, size = 0x1000, scoped, tag = 'scratch operand']
  #allocation3 [shape = 'f32[8,128]{1,0:T(8,128)}', space=vmem, size = 0x1000, scoped, tag = 'scratch operand']
  %s0 = inlined_call_operand.hbm [shape: bf16[8,8,512], index: 0, kind: input, shape index: {}]
  %s1 = inlined_call_operand.hbm [shape: bf16[128,512], index: 1, kind: input, shape index: {}]
  %s2 = inlined_call_operand.hbm [shape: f32[8,8,128], index: 2, kind: output, shape index: {}]
  %s3 = sld [smem:[#allocation0]]
  $region30: #{tpu_custom_call.1} parent=0
    _
  %s5 = ssub.s32 1, %s3
  %s6 = scalar_select 0, %s5, %s3
  $region1: #{tpu_custom_call.1} parent=0
    #allocation4 [shape = 'u8[65536]{0}', space=vmem, size = 0x10000, scoped, tag = 'input window, operand 0, single buffered']
    #allocation5 [shape = 's32[1]{0}', space=sflag, size = 0x4, scoped, tag = 'scoped memory for tpu_custom_call.1']
    #allocation6 [shape = 's32[1]{0}', space=sflag, size = 0x4, scoped, tag = 'scoped memory for tpu_custom_call.1']
    #allocation7 [shape = 'u8[131072]{0}', space=vmem, size = 0x20000, scoped, tag = 'input window, operand 1, single buffered']
    #allocation8 [shape = 's32[1]{0}', space=sflag, size = 0x4, scoped, tag = 'scoped memory for tpu_custom_call.1']
    #allocation9 [shape = 'u8[32768]{0}', space=vmem, size = 0x8000, scoped, tag = 'output window, operand 0, single buffered']
    %7 = vsyncpa [#allocation5], 0
    %8 = vsyncpa [#allocation8], 0
    %9 = vsyncpa [#allocation6], 0
    // Predicated region
    $region2: #{tpu_custom_call.1} parent=1 // pred_check
      _
    $region3: #{tpu_custom_call.1} parent=1 // pred_check_branch
      %11 = sbr.rel (0) target = $region5
    $region4: #{tpu_custom_call.1} parent=1 // pred_region
      %s13 = ssub.s32 2048, 2048
      %14 = vsyncadd [#allocation5], %s13
      %s15 = sshll.u32 [#allocation4], 4
      %s16 = int_to_ptr.vmem [resolvable:$true] %s15
      %21 = dma.hbm_to_vmem [thread:$0]  %s0, 2048, %s16, [#allocation5], 256, 256, 16
    $region5: #{tpu_custom_call.1} parent=1 // pred_fallthru
      _
    // Predicated region
    $region6: #{tpu_custom_call.1} parent=1 // pred_check
      _
    $region7: #{tpu_custom_call.1} parent=1 // pred_check_branch
      %23 = sbr.rel (0) target = $region9
    $region8: #{tpu_custom_call.1} parent=1 // pred_region
      %s25 = ssub.s32 4096, 4096
      %26 = vsyncadd [#allocation8], %s25
      %s27 = sshll.u32 [#allocation7], 4
      %s28 = int_to_ptr.vmem [resolvable:$true] %s27
      %33 = dma.hbm_to_vmem [thread:$0]  %s1, 4096, %s28, [#allocation8], 256, 256, 16
    $region9: #{tpu_custom_call.1} parent=1 // pred_fallthru
      _
    // Predicated region
    $region10: #{tpu_custom_call.1} parent=1 // pred_check
      _
    $region11: #{tpu_custom_call.1} parent=1 // pred_check_branch
      %35 = sbr.rel (0) target = $region13
    $region12: #{tpu_custom_call.1} parent=1 // pred_region
      %36 = dma.done [#allocation5], 2048
    $region13: #{tpu_custom_call.1} parent=1 // pred_fallthru
      _
    // Predicated region
    $region14: #{tpu_custom_call.1} parent=1 // pred_check
      _
    $region15: #{tpu_custom_call.1} parent=1 // pred_check_branch
      %38 = sbr.rel (0) target = $region17
    $region16: #{tpu_custom_call.1} parent=1 // pred_region
      %39 = dma.done [#allocation8], 4096
    $region17: #{tpu_custom_call.1} parent=1 // pred_fallthru
      _
    %p41 = scmp.eq.s32.totalorder 0, 0
    // Predicated region
    $region18: #{tpu_custom_call.1} parent=1 // pred_check
      %p42 = pneg %p41
    $region19: #{tpu_custom_call.1} parent=1 // pred_check_branch
      %44 = sbr.rel (%p42) target = $region21
    $region20: #{tpu_custom_call.1} parent=1 // pred_region
      %45 = vst [vmem:[#allocation2] sm:$0xff] 0.0
      %46 = vst [vmem:[#allocation3] sm:$0xff] 0.0
    $region21: #{tpu_custom_call.1} parent=1 // pred_fallthru
      _
    %v47 = vld [vmem:[#allocation2] sm:$0xff]
    %v48 = vld [vmem:[#allocation3] sm:$0xff]
    %v49 = vld [vmem:[#allocation4] sm:$0xff]
    %v50 = vld [vmem:[#allocation4 + $0x8] sm:$0xff]
    %v51 = vunpack.c.l.bf16 %v49
    %v52 = vunpack.c.h.bf16 %v49
    %v53 = vunpack.c.l.bf16 %v50
    %v54 = vunpack.c.h.bf16 %v50
    %v55 = vpack.c.bf16 %v47, %v47
    %v56 = vld [vmem:[#allocation7] sm:$0xff]
    %v57 = vld [vmem:[#allocation7 + $0x8] sm:$0xff]
    %v58 = vld [vmem:[#allocation7 + $0x10] sm:$0xff]
    %v59 = vld [vmem:[#allocation7 + $0x18] sm:$0xff]
    %v60 = vld [vmem:[#allocation7 + $0x20] sm:$0xff]
    %v61 = vld [vmem:[#allocation7 + $0x28] sm:$0xff]
    %v62 = vld [vmem:[#allocation7 + $0x30] sm:$0xff]
    %v63 = vld [vmem:[#allocation7 + $0x38] sm:$0xff]
    %v64 = vld [vmem:[#allocation7 + $0x40] sm:$0xff]
    %v65 = vld [vmem:[#allocation7 + $0x48] sm:$0xff]
    %v66 = vld [vmem:[#allocation7 + $0x50] sm:$0xff]
    %v67 = vld [vmem:[#allocation7 + $0x58] sm:$0xff]
    %v68 = vld [vmem:[#allocation7 + $0x60] sm:$0xff]
    %v69 = vld [vmem:[#allocation7 + $0x68] sm:$0xff]
    %v70 = vld [vmem:[#allocation7 + $0x70] sm:$0xff]
    %v71 = vld [vmem:[#allocation7 + $0x78] sm:$0xff]
    %v72 = vld [vmem:[#allocation7 + $0x80] sm:$0xff]
    %v73 = vld [vmem:[#allocation7 + $0x88] sm:$0xff]
    %v74 = vld [vmem:[#allocation7 + $0x90] sm:$0xff]
    %v75 = vld [vmem:[#allocation7 + $0x98] sm:$0xff]
    %v76 = vld [vmem:[#allocation7 + $0xa0] sm:$0xff]
    %v77 = vld [vmem:[#allocation7 + $0xa8] sm:$0xff]
    %v78 = vld [vmem:[#allocation7 + $0xb0] sm:$0xff]
    %v79 = vld [vmem:[#allocation7 + $0xb8] sm:$0xff]
    %v80 = vld [vmem:[#allocation7 + $0xc0] sm:$0xff]
    %v81 = vld [vmem:[#allocation7 + $0xc8] sm:$0xff]
    %v82 = vld [vmem:[#allocation7 + $0xd0] sm:$0xff]
    %v83 = vld [vmem:[#allocation7 + $0xd8] sm:$0xff]
    %v84 = vld [vmem:[#allocation7 + $0xe0] sm:$0xff]
    %v85 = vld [vmem:[#allocation7 + $0xe8] sm:$0xff]
    %v86 = vld [vmem:[#allocation7 + $0xf0] sm:$0xff]
    %v87 = vld [vmem:[#allocation7 + $0xf8] sm:$0xff]
    %v120 = vunpack.c.l.b16 %v56
    %v121 = vunpack.c.h.b16 %v56
    %v122 = vunpack.c.l.b16 %v57
    %v123 = vunpack.c.h.b16 %v57
    %v124 = vunpack.c.l.b16 %v58
    %v125 = vunpack.c.h.b16 %v58
    %v126 = vunpack.c.l.b16 %v59
    %v127 = vunpack.c.h.b16 %v59
    %v128 = vunpack.c.l.b16 %v60
    %v129 = vunpack.c.h.b16 %v60
    %v130 = vunpack.c.l.b16 %v61
    %v131 = vunpack.c.h.b16 %v61
    %v132 = vunpack.c.l.b16 %v62
    %v133 = vunpack.c.h.b16 %v62
    %v134 = vunpack.c.l.b16 %v63
    %v135 = vunpack.c.h.b16 %v63
    %v136 = vunpack.c.l.b16 %v64
    %v137 = vunpack.c.h.b16 %v64
    %v138 = vunpack.c.l.b16 %v65
    %v139 = vunpack.c.h.b16 %v65
    %v140 = vunpack.c.l.b16 %v66
    %v141 = vunpack.c.h.b16 %v66
    %v142 = vunpack.c.l.b16 %v67
    %v143 = vunpack.c.h.b16 %v67
    %v144 = vunpack.c.l.b16 %v68
    %v145 = vunpack.c.h.b16 %v68
    %v146 = vunpack.c.l.b16 %v69
    %v147 = vunpack.c.h.b16 %v69
    %v148 = vunpack.c.l.b16 %v70
    %v149 = vunpack.c.h.b16 %v70
    %v150 = vunpack.c.l.b16 %v71
    %v151 = vunpack.c.h.b16 %v71
    %v152 = vunpack.c.l.b16 %v72
    %v153 = vunpack.c.h.b16 %v72
    %v154 = vunpack.c.l.b16 %v73
    %v155 = vunpack.c.h.b16 %v73
    %v156 = vunpack.c.l.b16 %v74
    %v157 = vunpack.c.h.b16 %v74
    %v158 = vunpack.c.l.b16 %v75
    %v159 = vunpack.c.h.b16 %v75
    %v160 = vunpack.c.l.b16 %v76
    %v161 = vunpack.c.h.b16 %v76
    %v162 = vunpack.c.l.b16 %v77
    %v163 = vunpack.c.h.b16 %v77
    %v164 = vunpack.c.l.b16 %v78
    %v165 = vunpack.c.h.b16 %v78
    %v166 = vunpack.c.l.b16 %v79
    %v167 = vunpack.c.h.b16 %v79
    %v168 = vunpack.c.l.b16 %v80
    %v169 = vunpack.c.h.b16 %v80
    %v170 = vunpack.c.l.b16 %v81
    %v171 = vunpack.c.h.b16 %v81
    %v172 = vunpack.c.l.b16 %v82
    %v173 = vunpack.c.h.b16 %v82
    %v174 = vunpack.c.l.b16 %v83
    %v175 = vunpack.c.h.b16 %v83
    %v176 = vunpack.c.l.b16 %v84
    %v177 = vunpack.c.h.b16 %v84
    %v178 = vunpack.c.l.b16 %v85
    %v179 = vunpack.c.h.b16 %v85
    %v180 = vunpack.c.l.b16 %v86
    %v181 = vunpack.c.h.b16 %v86
    %v182 = vunpack.c.l.b16 %v87
    %v183 = vunpack.c.h.b16 %v87
    %v184 = vpack.c.b16 %v124, %v120
    %v185 = vpack.c.b16 %v125, %v121
    %v186 = vpack.c.b16 %v126, %v122
    %v187 = vpack.c.b16 %v127, %v123
    %v188 = vpack.c.b16 %v132, %v128
    %v189 = vpack.c.b16 %v133, %v129
    %v190 = vpack.c.b16 %v134, %v130
    %v191 = vpack.c.b16 %v135, %v131
    %v192 = vpack.c.b16 %v140, %v136
    %v193 = vpack.c.b16 %v141, %v137
    %v194 = vpack.c.b16 %v142, %v138
    %v195 = vpack.c.b16 %v143, %v139
    %v196 = vpack.c.b16 %v148, %v144
    %v197 = vpack.c.b16 %v149, %v145
    %v198 = vpack.c.b16 %v150, %v146
    %v199 = vpack.c.b16 %v151, %v147
    %v200 = vpack.c.b16 %v156, %v152
    %v201 = vpack.c.b16 %v157, %v153
    %v202 = vpack.c.b16 %v158, %v154
    %v203 = vpack.c.b16 %v159, %v155
    %v204 = vpack.c.b16 %v164, %v160
    %v205 = vpack.c.b16 %v165, %v161
    %v206 = vpack.c.b16 %v166, %v162
    %v207 = vpack.c.b16 %v167, %v163
    %v208 = vpack.c.b16 %v172, %v168
    %v209 = vpack.c.b16 %v173, %v169
    %v210 = vpack.c.b16 %v174, %v170
    %v211 = vpack.c.b16 %v175, %v171
    %v212 = vpack.c.b16 %v180, %v176
    %v213 = vpack.c.b16 %v181, %v177
    %v214 = vpack.c.b16 %v182, %v178
    %v215 = vpack.c.b16 %v183, %v179
    %248 = vmatprep.subr.bf16.mxu0 %v185
    %249 = vmatpush1.bf16.msra.mxu0 %v184
    %250 = vmatprep.subr.bf16.mxu0 %v189
    %251 = vmatpush1.bf16.msra.mxu0 %v188
    %252 = vmatprep.subr.bf16.mxu0 %v193
    %253 = vmatpush1.bf16.msra.mxu0 %v192
    %254 = vmatprep.subr.bf16.mxu0 %v197
    %255 = vmatpush1.bf16.msra.mxu0 %v196
    %256 = vmatprep.subr.bf16.mxu0 %v201
    %257 = vmatpush1.bf16.msra.mxu0 %v200
    %258 = vmatprep.subr.bf16.mxu0 %v205
    %259 = vmatpush1.bf16.msra.mxu0 %v204
    %260 = vmatprep.subr.bf16.mxu0 %v209
    %261 = vmatpush1.bf16.msra.mxu0 %v208
    %262 = vmatprep.subr.bf16.mxu0 %v213
    %263 = vmatpush1.bf16.msra.mxu0 %v212
    %264 = vmatprep.subr.bf16.mxu0 0
    %265 = vmatpush1.bf16.msra.mxu0 0
    %266 = vmatprep.subr.bf16.mxu0 0
    %267 = vmatpush1.bf16.msra.mxu0 0
    %268 = vmatprep.subr.bf16.mxu0 0
    %269 = vmatpush1.bf16.msra.mxu0 0
    %270 = vmatprep.subr.bf16.mxu0 0
    %271 = vmatpush1.bf16.msra.mxu0 0
    %272 = vmatprep.subr.bf16.mxu0 0
    %273 = vmatpush1.bf16.msra.mxu0 0
    %274 = vmatprep.subr.bf16.mxu0 0
    %275 = vmatpush1.bf16.msra.mxu0 0
    %276 = vmatprep.subr.bf16.mxu0 0
    %277 = vmatpush1.bf16.msra.mxu0 0
    %278 = vmatprep.subr.bf16.mxu0 0
    %279 = vmatpush1.bf16.msra.mxu0 0
    %280 = vmatprep.mubr.bf16.mxu0 0
    %281 = vmatmul.mubr.bf16.gmra.mrb[0].mxu0 %v55
    %v282 = vpop.f32.mrb[0].mxu0
    %v283 = vadd.f32 0.0, %v282
    %v284 = vpop.f32.mrb[0].mxu0
    %v285 = vadd.f32 0.0, %v284
    %v286 = vpop.f32.mrb[0].mxu0
    %v287 = vpop.f32.mrb[0].mxu0
    %288 = vdwg.mxu0
    %289 = vmatprep.subr.bf16.mxu0 %v187
    %290 = vmatpush1.bf16.msra.mxu0 %v186
    %291 = vmatprep.subr.bf16.mxu0 %v191
    %292 = vmatpush1.bf16.msra.mxu0 %v190
    %293 = vmatprep.subr.bf16.mxu0 %v195
    %294 = vmatpush1.bf16.msra.mxu0 %v194
    %295 = vmatprep.subr.bf16.mxu0 %v199
    %296 = vmatpush1.bf16.msra.mxu0 %v198
    %297 = vmatprep.subr.bf16.mxu0 %v203
    %298 = vmatpush1.bf16.msra.mxu0 %v202
    %299 = vmatprep.subr.bf16.mxu0 %v207
    %300 = vmatpush1.bf16.msra.mxu0 %v206
    %301 = vmatprep.subr.bf16.mxu0 %v211
    %302 = vmatpush1.bf16.msra.mxu0 %v210
    %303 = vmatprep.subr.bf16.mxu0 %v215
    %304 = vmatpush1.bf16.msra.mxu0 %v214
    %305 = vmatprep.subr.bf16.mxu0 0
    %306 = vmatpush1.bf16.msra.mxu0 0
    %307 = vmatprep.subr.bf16.mxu0 0
    %308 = vmatpush1.bf16.msra.mxu0 0
    %309 = vmatprep.subr.bf16.mxu0 0
    %310 = vmatpush1.bf16.msra.mxu0 0
    %311 = vmatprep.subr.bf16.mxu0 0
    %312 = vmatpush1.bf16.msra.mxu0 0
    %313 = vmatprep.subr.bf16.mxu0 0
    %314 = vmatpush1.bf16.msra.mxu0 0
    %315 = vmatprep.subr.bf16.mxu0 0
    %316 = vmatpush1.bf16.msra.mxu0 0
    %317 = vmatprep.subr.bf16.mxu0 0
    %318 = vmatpush1.bf16.msra.mxu0 0
    %319 = vmatprep.subr.bf16.mxu0 0
    %320 = vmatpush1.bf16.msra.mxu0 0
    %321 = vmatprep.mubr.bf16.mxu0 0
    %322 = vmatmul.mubr.bf16.gmra.mrb[0].mxu0 %v55
    %v323 = vpop.f32.mrb[0].mxu0
    %v324 = vadd.f32 0.0, %v323
    %v325 = vpop.f32.mrb[0].mxu0
    %v326 = vadd.f32 0.0, %v325
    %v327 = vpop.f32.mrb[0].mxu0
    %v328 = vpop.f32.mrb[0].mxu0
    %329 = vdwg.mxu0
    %v330 = vadd.f32 %v51, %v283
    %v331 = vadd.f32 %v52, %v285
    %v332 = vadd.f32 %v53, %v324
    %v333 = vadd.f32 %v54, %v326
    %v334 = vmul.f32 %v330, 0.5
    %v335 = vtanh.pop %v334
    %v336 = vadd.f32 %v335, 1.0
    %v337 = vmul.f32 %v336, 0.5
    %v338 = vmul.f32 %v331, 0.5
    %v339 = vtanh.pop %v338
    %v340 = vadd.f32 %v339, 1.0
    %v341 = vmul.f32 %v340, 0.5
    %v342 = vtanh.pop %v332
    %v343 = vmul.f32 %v333, 0.5
    %v344 = vtanh.pop %v343
    %v345 = vadd.f32 %v344, 1.0
    %v346 = vmul.f32 %v345, 0.5
    %v347 = vmul.f32 %v341, %v48
    %v348 = vmul.f32 %v337, %v342
    %v349 = vadd.f32 %v347, %v348
    %v350 = vtanh.pop %v349
    %v351 = vmul.f32 %v346, %v350
    %352 = vst [vmem:[#allocation9] sm:$0xff] %v351
    %s353 = scalar_lea.vmem [#allocation4], 16
    %v354 = vld [vmem:[%s353] sm:$0xff]
    %v355 = vld [vmem:[%s353 + $0x8] sm:$0xff]
    %v356 = vunpack.c.l.bf16 %v354
    %v357 = vunpack.c.h.bf16 %v354
    %v358 = vunpack.c.l.bf16 %v355
    %v359 = vunpack.c.h.bf16 %v355
    %v360 = vpack.c.bf16 %v351, %v351
    %v361 = vld [vmem:[#allocation7] sm:$0xff]
    %v362 = vld [vmem:[#allocation7 + $0x8] sm:$0xff]
    %v363 = vld [vmem:[#allocation7 + $0x10] sm:$0xff]
    %v364 = vld [vmem:[#allocation7 + $0x18] sm:$0xff]
    %v365 = vld [vmem:[#allocation7 + $0x20] sm:$0xff]
    %v366 = vld [vmem:[#allocation7 + $0x28] sm:$0xff]
    %v367 = vld [vmem:[#allocation7 + $0x30] sm:$0xff]
    %v368 = vld [vmem:[#allocation7 + $0x38] sm:$0xff]
    %v369 = vld [vmem:[#allocation7 + $0x40] sm:$0xff]
    %v370 = vld [vmem:[#allocation7 + $0x48] sm:$0xff]
    %v371 = vld [vmem:[#allocation7 + $0x50] sm:$0xff]
    %v372 = vld [vmem:[#allocation7 + $0x58] sm:$0xff]
    %v373 = vld [vmem:[#allocation7 + $0x60] sm:$0xff]
    %v374 = vld [vmem:[#allocation7 + $0x68] sm:$0xff]
    %v375 = vld [vmem:[#allocation7 + $0x70] sm:$0xff]
    %v376 = vld [vmem:[#allocation7 + $0x78] sm:$0xff]
    %v377 = vld [vmem:[#allocation7 + $0x80] sm:$0xff]
    %v378 = vld [vmem:[#allocation7 + $0x88] sm:$0xff]
    %v379 = vld [vmem:[#allocation7 + $0x90] sm:$0xff]
    %v380 = vld [vmem:[#allocation7 + $0x98] sm:$0xff]
    %v381 = vld [vmem:[#allocation7 + $0xa0] sm:$0xff]
    %v382 = vld [vmem:[#allocation7 + $0xa8] sm:$0xff]
    %v383 = vld [vmem:[#allocation7 + $0xb0] sm:$0xff]
    %v384 = vld [vmem:[#allocation7 + $0xb8] sm:$0xff]
    %v385 = vld [vmem:[#allocation7 + $0xc0] sm:$0xff]
    %v386 = vld [vmem:[#allocation7 + $0xc8] sm:$0xff]
    %v387 = vld [vmem:[#allocation7 + $0xd0] sm:$0xff]
    %v388 = vld [vmem:[#allocation7 + $0xd8] sm:$0xff]
    %v389 = vld [vmem:[#allocation7 + $0xe0] sm:$0xff]
    %v390 = vld [vmem:[#allocation7 + $0xe8] sm:$0xff]
    %v391 = vld [vmem:[#allocation7 + $0xf0] sm:$0xff]
    %v392 = vld [vmem:[#allocation7 + $0xf8] sm:$0xff]
    %v425 = vunpack.c.l.b16 %v361
    %v426 = vunpack.c.h.b16 %v361
    %v427 = vunpack.c.l.b16 %v362
    %v428 = vunpack.c.h.b16 %v362
    %v429 = vunpack.c.l.b16 %v363
    %v430 = vunpack.c.h.b16 %v363
    %v431 = vunpack.c.l.b16 %v364
    %v432 = vunpack.c.h.b16 %v364
    %v433 = vunpack.c.l.b16 %v365
    %v434 = vunpack.c.h.b16 %v365
    %v435 = vunpack.c.l.b16 %v366
    %v436 = vunpack.c.h.b16 %v366
    %v437 = vunpack.c.l.b16 %v367
    %v438 = vunpack.c.h.b16 %v367
    %v439 = vunpack.c.l.b16 %v368
    %v440 = vunpack.c.h.b16 %v368
    %v441 = vunpack.c.l.b16 %v369
    %v442 = vunpack.c.h.b16 %v369
    %v443 = vunpack.c.l.b16 %v370
    %v444 = vunpack.c.h.b16 %v370
    %v445 = vunpack.c.l.b16 %v371
    %v446 = vunpack.c.h.b16 %v371
    %v447 = vunpack.c.l.b16 %v372
    %v448 = vunpack.c.h.b16 %v372
    %v449 = vunpack.c.l.b16 %v373
    %v450 = vunpack.c.h.b16 %v373
    %v451 = vunpack.c.l.b16 %v374
    %v452 = vunpack.c.h.b16 %v374
    %v453 = vunpack.c.l.b16 %v375
    %v454 = vunpack.c.h.b16 %v375
    %v455 = vunpack.c.l.b16 %v376
    %v456 = vunpack.c.h.b16 %v376
    %v457 = vunpack.c.l.b16 %v377
    %v458 = vunpack.c.h.b16 %v377
    %v459 = vunpack.c.l.b16 %v378
    %v460 = vunpack.c.h.b16 %v378
    %v461 = vunpack.c.l.b16 %v379
    %v462 = vunpack.c.h.b16 %v379
    %v463 = vunpack.c.l.b16 %v380
    %v464 = vunpack.c.h.b16 %v380
    %v465 = vunpack.c.l.b16 %v381
    %v466 = vunpack.c.h.b16 %v381
    %v467 = vunpack.c.l.b16 %v382
    %v468 = vunpack.c.h.b16 %v382
    %v469 = vunpack.c.l.b16 %v383
    %v470 = vunpack.c.h.b16 %v383
    %v471 = vunpack.c.l.b16 %v384
    %v472 = vunpack.c.h.b16 %v384
    %v473 = vunpack.c.l.b16 %v385
    %v474 = vunpack.c.h.b16 %v385
    %v475 = vunpack.c.l.b16 %v386
    %v476 = vunpack.c.h.b16 %v386
    %v477 = vunpack.c.l.b16 %v387
    %v478 = vunpack.c.h.b16 %v387
    %v479 = vunpack.c.l.b16 %v388
    %v480 = vunpack.c.h.b16 %v388
    %v481 = vunpack.c.l.b16 %v389
    %v482 = vunpack.c.h.b16 %v389
    %v483 = vunpack.c.l.b16 %v390
    %v484 = vunpack.c.h.b16 %v390
    %v485 = vunpack.c.l.b16 %v391
    %v486 = vunpack.c.h.b16 %v391
    %v487 = vunpack.c.l.b16 %v392
    %v488 = vunpack.c.h.b16 %v392
    %v489 = vpack.c.b16 %v429, %v425
    %v490 = vpack.c.b16 %v430, %v426
    %v491 = vpack.c.b16 %v431, %v427
    %v492 = vpack.c.b16 %v432, %v428
    %v493 = vpack.c.b16 %v437, %v433
    %v494 = vpack.c.b16 %v438, %v434
    %v495 = vpack.c.b16 %v439, %v435
    %v496 = vpack.c.b16 %v440, %v436
    %v497 = vpack.c.b16 %v445, %v441
    %v498 = vpack.c.b16 %v446, %v442
    %v499 = vpack.c.b16 %v447, %v443
    %v500 = vpack.c.b16 %v448, %v444
    %v501 = vpack.c.b16 %v453, %v449
    %v502 = vpack.c.b16 %v454, %v450
    %v503 = vpack.c.b16 %v455, %v451
    %v504 = vpack.c.b16 %v456, %v452
    %v505 = vpack.c.b16 %v461, %v457
    %v506 = vpack.c.b16 %v462, %v458
    %v507 = vpack.c.b16 %v463, %v459
    %v508 = vpack.c.b16 %v464, %v460
    %v509 = vpack.c.b16 %v469, %v465
    %v510 = vpack.c.b16 %v470, %v466
    %v511 = vpack.c.b16 %v471, %v467
    %v512 = vpack.c.b16 %v472, %v468
    %v513 = vpack.c.b16 %v477, %v473
    %v514 = vpack.c.b16 %v478, %v474
    %v515 = vpack.c.b16 %v479, %v475
    %v516 = vpack.c.b16 %v480, %v476
    %v517 = vpack.c.b16 %v485, %v481
    %v518 = vpack.c.b16 %v486, %v482
    %v519 = vpack.c.b16 %v487, %v483
    %v520 = vpack.c.b16 %v488, %v484
    %553 = vmatprep.subr.bf16.mxu0 %v490
    %554 = vmatpush1.bf16.msra.mxu0 %v489
    %555 = vmatprep.subr.bf16.mxu0 %v494
    %556 = vmatpush1.bf16.msra.mxu0 %v493
    %557 = vmatprep.subr.bf16.mxu0 %v498
    %558 = vmatpush1.bf16.msra.mxu0 %v497
    %559 = vmatprep.subr.bf16.mxu0 %v502
    %560 = vmatpush1.bf16.msra.mxu0 %v501
    %561 = vmatprep.subr.bf16.mxu0 %v506
    %562 = vmatpush1.bf16.msra.mxu0 %v505
    %563 = vmatprep.subr.bf16.mxu0 %v510
    %564 = vmatpush1.bf16.msra.mxu0 %v509
    %565 = vmatprep.subr.bf16.mxu0 %v514
    %566 = vmatpush1.bf16.msra.mxu0 %v513
    %567 = vmatprep.subr.bf16.mxu0 %v518
    %568 = vmatpush1.bf16.msra.mxu0 %v517
    %569 = vmatprep.subr.bf16.mxu0 0
    %570 = vmatpush1.bf16.msra.mxu0 0
    %571 = vmatprep.subr.bf16.mxu0 0
    %572 = vmatpush1.bf16.msra.mxu0 0
    %573 = vmatprep.subr.bf16.mxu0 0
    %574 = vmatpush1.bf16.msra.mxu0 0
    %575 = vmatprep.subr.bf16.mxu0 0
    %576 = vmatpush1.bf16.msra.mxu0 0
    %577 = vmatprep.subr.bf16.mxu0 0
    %578 = vmatpush1.bf16.msra.mxu0 0
    %579 = vmatprep.subr.bf16.mxu0 0
    %580 = vmatpush1.bf16.msra.mxu0 0
    %581 = vmatprep.subr.bf16.mxu0 0
    %582 = vmatpush1.bf16.msra.mxu0 0
    %583 = vmatprep.subr.bf16.mxu0 0
    %584 = vmatpush1.bf16.msra.mxu0 0
    %585 = vmatprep.mubr.bf16.mxu0 0
    %586 = vmatmul.mubr.bf16.gmra.mrb[0].mxu0 %v360
    %v587 = vpop.f32.mrb[0].mxu0
    %v588 = vadd.f32 0.0, %v587
    %v589 = vpop.f32.mrb[0].mxu0
    %v590 = vadd.f32 0.0, %v589
    %v591 = vpop.f32.mrb[0].mxu0
    %v592 = vpop.f32.mrb[0].mxu0
    %593 = vdwg.mxu0
    %594 = vmatprep.subr.bf16.mxu0 %v492
    %595 = vmatpush1.bf16.msra.mxu0 %v491
    %596 = vmatprep.subr.bf16.mxu0 %v496
    %597 = vmatpush1.bf16.msra.mxu0 %v495
    %598 = vmatprep.subr.bf16.mxu0 %v500
    %599 = vmatpush1.bf16.msra.mxu0 %v499
    %600 = vmatprep.subr.bf16.mxu0 %v504
    %601 = vmatpush1.bf16.msra.mxu0 %v503
    %602 = vmatprep.subr.bf16.mxu0 %v508
    %603 = vmatpush1.bf16.msra.mxu0 %v507
    %604 = vmatprep.subr.bf16.mxu0 %v512
    %605 = vmatpush1.bf16.msra.mxu0 %v511
    %606 = vmatprep.subr.bf16.mxu0 %v516
    %607 = vmatpush1.bf16.msra.mxu0 %v515
    %608 = vmatprep.subr.bf16.mxu0 %v520
    %609 = vmatpush1.bf16.msra.mxu0 %v519
    %610 = vmatprep.subr.bf16.mxu0 0
    %611 = vmatpush1.bf16.msra.mxu0 0
    %612 = vmatprep.subr.bf16.mxu0 0
    %613 = vmatpush1.bf16.msra.mxu0 0
    %614 = vmatprep.subr.bf16.mxu0 0
    %615 = vmatpush1.bf16.msra.mxu0 0
    %616 = vmatprep.subr.bf16.mxu0 0
    %617 = vmatpush1.bf16.msra.mxu0 0
    %618 = vmatprep.subr.bf16.mxu0 0
    %619 = vmatpush1.bf16.msra.mxu0 0
    %620 = vmatprep.subr.bf16.mxu0 0
    %621 = vmatpush1.bf16.msra.mxu0 0
    %622 = vmatprep.subr.bf16.mxu0 0
    %623 = vmatpush1.bf16.msra.mxu0 0
    %624 = vmatprep.subr.bf16.mxu0 0
    %625 = vmatpush1.bf16.msra.mxu0 0
    %626 = vmatprep.mubr.bf16.mxu0 0
    %627 = vmatmul.mubr.bf16.gmra.mrb[0].mxu0 %v360
    %v628 = vpop.f32.mrb[0].mxu0
    %v629 = vadd.f32 0.0, %v628
    %v630 = vpop.f32.mrb[0].mxu0
    %v631 = vadd.f32 0.0, %v630
    %v632 = vpop.f32.mrb[0].mxu0
    %v633 = vpop.f32.mrb[0].mxu0
    %634 = vdwg.mxu0
    %v635 = vadd.f32 %v356, %v588
    %v636 = vadd.f32 %v357, %v590
    %v637 = vadd.f32 %v358, %v629
    %v638 = vadd.f32 %v359, %v631
    %v639 = vmul.f32 %v635, 0.5
    %v640 = vtanh.pop %v639
    %v641 = vadd.f32 %v640, 1.0
    %v642 = vmul.f32 %v641, 0.5
    %v643 = vmul.f32 %v636, 0.5
    %v644 = vtanh.pop %v643
    %v645 = vadd.f32 %v644, 1.0
    %v646 = vmul.f32 %v645, 0.5
    %v647 = vtanh.pop %v637
    %v648 = vmul.f32 %v638, 0.5
    %v649 = vtanh.pop %v648
    %v650 = vadd.f32 %v649, 1.0
    %v651 = vmul.f32 %v650, 0.5
    %v652 = vmul.f32 %v646, %v349
    %v653 = vmul.f32 %v642, %v647
    %v654 = vadd.f32 %v652, %v653
    %v655 = vtanh.pop %v654
    %v656 = vmul.f32 %v651, %v655
    %s657 = scalar_lea.vmem [#allocation9], 8
    %658 = vst [vmem:[%s657] sm:$0xff] %v656
    %s659 = scalar_lea.vmem [#allocation4], 32
    %v660 = vld [vmem:[%s659] sm:$0xff]
    %v661 = vld [vmem:[%s659 + $0x8] sm:$0xff]
    %v662 = vunpack.c.l.bf16 %v660
    %v663 = vunpack.c.h.bf16 %v660
    %v664 = vunpack.c.l.bf16 %v661
    %v665 = vunpack.c.h.bf16 %v661
    %v666 = vpack.c.bf16 %v656, %v656
    %v667 = vld [vmem:[#allocation7] sm:$0xff]
    %v668 = vld [vmem:[#allocation7 + $0x8] sm:$0xff]
    %v669 = vld [vmem:[#allocation7 + $0x10] sm:$0xff]
    %v670 = vld [vmem:[#allocation7 + $0x18] sm:$0xff]
    %v671 = vld [vmem:[#allocation7 + $0x20] sm:$0xff]
    %v672 = vld [vmem:[#allocation7 + $0x28] sm:$0xff]
    %v673 = vld [vmem:[#allocation7 + $0x30] sm:$0xff]
    %v674 = vld [vmem:[#allocation7 + $0x38] sm:$0xff]
    %v675 = vld [vmem:[#allocation7 + $0x40] sm:$0xff]
    %v676 = vld [vmem:[#allocation7 + $0x48] sm:$0xff]
    %v677 = vld [vmem:[#allocation7 + $0x50] sm:$0xff]
    %v678 = vld [vmem:[#allocation7 + $0x58] sm:$0xff]
    %v679 = vld [vmem:[#allocation7 + $0x60] sm:$0xff]
    %v680 = vld [vmem:[#allocation7 + $0x68] sm:$0xff]
    %v681 = vld [vmem:[#allocation7 + $0x70] sm:$0xff]
    %v682 = vld [vmem:[#allocation7 + $0x78] sm:$0xff]
    %v683 = vld [vmem:[#allocation7 + $0x80] sm:$0xff]
    %v684 = vld [vmem:[#allocation7 + $0x88] sm:$0xff]
    %v685 = vld [vmem:[#allocation7 + $0x90] sm:$0xff]
    %v686 = vld [vmem:[#allocation7 + $0x98] sm:$0xff]
    %v687 = vld [vmem:[#allocation7 + $0xa0] sm:$0xff]
    %v688 = vld [vmem:[#allocation7 + $0xa8] sm:$0xff]
    %v689 = vld [vmem:[#allocation7 + $0xb0] sm:$0xff]
    %v690 = vld [vmem:[#allocation7 + $0xb8] sm:$0xff]
    %v691 = vld [vmem:[#allocation7 + $0xc0] sm:$0xff]
    %v692 = vld [vmem:[#allocation7 + $0xc8] sm:$0xff]
    %v693 = vld [vmem:[#allocation7 + $0xd0] sm:$0xff]
    %v694 = vld [vmem:[#allocation7 + $0xd8] sm:$0xff]
    %v695 = vld [vmem:[#allocation7 + $0xe0] sm:$0xff]
    %v696 = vld [vmem:[#allocation7 + $0xe8] sm:$0xff]
    %v697 = vld [vmem:[#allocation7 + $0xf0] sm:$0xff]
    %v698 = vld [vmem:[#allocation7 + $0xf8] sm:$0xff]
    %v731 = vunpack.c.l.b16 %v667
    %v732 = vunpack.c.h.b16 %v667
    %v733 = vunpack.c.l.b16 %v668
    %v734 = vunpack.c.h.b16 %v668
    %v735 = vunpack.c.l.b16 %v669
    %v736 = vunpack.c.h.b16 %v669
    %v737 = vunpack.c.l.b16 %v670
    %v738 = vunpack.c.h.b16 %v670
    %v739 = vunpack.c.l.b16 %v671
    %v740 = vunpack.c.h.b16 %v671
    %v741 = vunpack.c.l.b16 %v672
    %v742 = vunpack.c.h.b16 %v672
    %v743 = vunpack.c.l.b16 %v673
    %v744 = vunpack.c.h.b16 %v673
    %v745 = vunpack.c.l.b16 %v674
    %v746 = vunpack.c.h.b16 %v674
    %v747 = vunpack.c.l.b16 %v675
    %v748 = vunpack.c.h.b16 %v675
    %v749 = vunpack.c.l.b16 %v676
    %v750 = vunpack.c.h.b16 %v676
    %v751 = vunpack.c.l.b16 %v677
    %v752 = vunpack.c.h.b16 %v677
    %v753 = vunpack.c.l.b16 %v678
    %v754 = vunpack.c.h.b16 %v678
    %v755 = vunpack.c.l.b16 %v679
    %v756 = vunpack.c.h.b16 %v679
    %v757 = vunpack.c.l.b16 %v680
    %v758 = vunpack.c.h.b16 %v680
    %v759 = vunpack.c.l.b16 %v681
    %v760 = vunpack.c.h.b16 %v681
    %v761 = vunpack.c.l.b16 %v682
    %v762 = vunpack.c.h.b16 %v682
    %v763 = vunpack.c.l.b16 %v683
    %v764 = vunpack.c.h.b16 %v683
    %v765 = vunpack.c.l.b16 %v684
    %v766 = vunpack.c.h.b16 %v684
    %v767 = vunpack.c.l.b16 %v685
    %v768 = vunpack.c.h.b16 %v685
    %v769 = vunpack.c.l.b16 %v686
    %v770 = vunpack.c.h.b16 %v686
    %v771 = vunpack.c.l.b16 %v687
    %v772 = vunpack.c.h.b16 %v687
    %v773 = vunpack.c.l.b16 %v688
    %v774 = vunpack.c.h.b16 %v688
    %v775 = vunpack.c.l.b16 %v689
    %v776 = vunpack.c.h.b16 %v689
    %v777 = vunpack.c.l.b16 %v690
    %v778 = vunpack.c.h.b16 %v690
    %v779 = vunpack.c.l.b16 %v691
    %v780 = vunpack.c.h.b16 %v691
    %v781 = vunpack.c.l.b16 %v692
    %v782 = vunpack.c.h.b16 %v692
    %v783 = vunpack.c.l.b16 %v693
    %v784 = vunpack.c.h.b16 %v693
    %v785 = vunpack.c.l.b16 %v694
    %v786 = vunpack.c.h.b16 %v694
    %v787 = vunpack.c.l.b16 %v695
    %v788 = vunpack.c.h.b16 %v695
    %v789 = vunpack.c.l.b16 %v696
    %v790 = vunpack.c.h.b16 %v696
    %v791 = vunpack.c.l.b16 %v697
    %v792 = vunpack.c.h.b16 %v697
    %v793 = vunpack.c.l.b16 %v698
    %v794 = vunpack.c.h.b16 %v698
    %v795 = vpack.c.b16 %v735, %v731
    %v796 = vpack.c.b16 %v736, %v732
    %v797 = vpack.c.b16 %v737, %v733
    %v798 = vpack.c.b16 %v738, %v734
    %v799 = vpack.c.b16 %v743, %v739
    %v800 = vpack.c.b16 %v744, %v740
    %v801 = vpack.c.b16 %v745, %v741
    %v802 = vpack.c.b16 %v746, %v742
    %v803 = vpack.c.b16 %v751, %v747
    %v804 = vpack.c.b16 %v752, %v748
    %v805 = vpack.c.b16 %v753, %v749
    %v806 = vpack.c.b16 %v754, %v750
    %v807 = vpack.c.b16 %v759, %v755
    %v808 = vpack.c.b16 %v760, %v756
    %v809 = vpack.c.b16 %v761, %v757
    %v810 = vpack.c.b16 %v762, %v758
    %v811 = vpack.c.b16 %v767, %v763
    %v812 = vpack.c.b16 %v768, %v764
    %v813 = vpack.c.b16 %v769, %v765
    %v814 = vpack.c.b16 %v770, %v766
    %v815 = vpack.c.b16 %v775, %v771
    %v816 = vpack.c.b16 %v776, %v772
    %v817 = vpack.c.b16 %v777, %v773
    %v818 = vpack.c.b16 %v778, %v774
    %v819 = vpack.c.b16 %v783, %v779
    %v820 = vpack.c.b16 %v784, %v780
    %v821 = vpack.c.b16 %v785, %v781
    %v822 = vpack.c.b16 %v786, %v782
    %v823 = vpack.c.b16 %v791, %v787
    %v824 = vpack.c.b16 %v792, %v788
    %v825 = vpack.c.b16 %v793, %v789
    %v826 = vpack.c.b16 %v794, %v790
    %859 = vmatprep.subr.bf16.mxu0 %v796
    %860 = vmatpush1.bf16.msra.mxu0 %v795
    %861 = vmatprep.subr.bf16.mxu0 %v800
    %862 = vmatpush1.bf16.msra.mxu0 %v799
    %863 = vmatprep.subr.bf16.mxu0 %v804
    %864 = vmatpush1.bf16.msra.mxu0 %v803
    %865 = vmatprep.subr.bf16.mxu0 %v808
    %866 = vmatpush1.bf16.msra.mxu0 %v807
    %867 = vmatprep.subr.bf16.mxu0 %v812
    %868 = vmatpush1.bf16.msra.mxu0 %v811
    %869 = vmatprep.subr.bf16.mxu0 %v816
    %870 = vmatpush1.bf16.msra.mxu0 %v815
    %871 = vmatprep.subr.bf16.mxu0 %v820
    %872 = vmatpush1.bf16.msra.mxu0 %v819
    %873 = vmatprep.subr.bf16.mxu0 %v824
    %874 = vmatpush1.bf16.msra.mxu0 %v823
    %875 = vmatprep.subr.bf16.mxu0 0
    %876 = vmatpush1.bf16.msra.mxu0 0
    %877 = vmatprep.subr.bf16.mxu0 0
    %878 = vmatpush1.bf16.msra.mxu0 0
    %879 = vmatprep.subr.bf16.mxu0 0
    %880 = vmatpush1.bf16.msra.mxu0 0
    %881 = vmatprep.subr.bf16.mxu0 0
    %882 = vmatpush1.bf16.msra.mxu0 0
    %883 = vmatprep.subr.bf16.mxu0 0
    %884 = vmatpush1.bf16.msra.mxu0 0
    %885 = vmatprep.subr.bf16.mxu0 0
    %886 = vmatpush1.bf16.msra.mxu0 0
    %887 = vmatprep.subr.bf16.mxu0 0
    %888 = vmatpush1.bf16.msra.mxu0 0
    %889 = vmatprep.subr.bf16.mxu0 0
    %890 = vmatpush1.bf16.msra.mxu0 0
    %891 = vmatprep.mubr.bf16.mxu0 0
    %892 = vmatmul.mubr.bf16.gmra.mrb[0].mxu0 %v666
    %v893 = vpop.f32.mrb[0].mxu0
    %v894 = vadd.f32 0.0, %v893
    %v895 = vpop.f32.mrb[0].mxu0
    %v896 = vadd.f32 0.0, %v895
    %v897 = vpop.f32.mrb[0].mxu0
    %v898 = vpop.f32.mrb[0].mxu0
    %899 = vdwg.mxu0
    %900 = vmatprep.subr.bf16.mxu0 %v798
    %901 = vmatpush1.bf16.msra.mxu0 %v797
    %902 = vmatprep.subr.bf16.mxu0 %v802
    %903 = vmatpush1.bf16.msra.mxu0 %v801
    %904 = vmatprep.subr.bf16.mxu0 %v806
    %905 = vmatpush1.bf16.msra.mxu0 %v805
    %906 = vmatprep.subr.bf16.mxu0 %v810
    %907 = vmatpush1.bf16.msra.mxu0 %v809
    %908 = vmatprep.subr.bf16.mxu0 %v814
    %909 = vmatpush1.bf16.msra.mxu0 %v813
    %910 = vmatprep.subr.bf16.mxu0 %v818
    %911 = vmatpush1.bf16.msra.mxu0 %v817
    %912 = vmatprep.subr.bf16.mxu0 %v822
    %913 = vmatpush1.bf16.msra.mxu0 %v821
    %914 = vmatprep.subr.bf16.mxu0 %v826
    %915 = vmatpush1.bf16.msra.mxu0 %v825
    %916 = vmatprep.subr.bf16.mxu0 0
    %917 = vmatpush1.bf16.msra.mxu0 0
    %918 = vmatprep.subr.bf16.mxu0 0
    %919 = vmatpush1.bf16.msra.mxu0 0
    %920 = vmatprep.subr.bf16.mxu0 0
    %921 = vmatpush1.bf16.msra.mxu0 0
    %922 = vmatprep.subr.bf16.mxu0 0
    %923 = vmatpush1.bf16.msra.mxu0 0
    %924 = vmatprep.subr.bf16.mxu0 0
    %925 = vmatpush1.bf16.msra.mxu0 0
    %926 = vmatprep.subr.bf16.mxu0 0
    %927 = vmatpush1.bf16.msra.mxu0 0
    %928 = vmatprep.subr.bf16.mxu0 0
    %929 = vmatpush1.bf16.msra.mxu0 0
    %930 = vmatprep.subr.bf16.mxu0 0
    %931 = vmatpush1.bf16.msra.mxu0 0
    %932 = vmatprep.mubr.bf16.mxu0 0
    %933 = vmatmul.mubr.bf16.gmra.mrb[0].mxu0 %v666
    %v934 = vpop.f32.mrb[0].mxu0
    %v935 = vadd.f32 0.0, %v934
    %v936 = vpop.f32.mrb[0].mxu0
    %v937 = vadd.f32 0.0, %v936
    %v938 = vpop.f32.mrb[0].mxu0
    %v939 = vpop.f32.mrb[0].mxu0
    %940 = vdwg.mxu0
    %v941 = vadd.f32 %v662, %v894
    %v942 = vadd.f32 %v663, %v896
    %v943 = vadd.f32 %v664, %v935
    %v944 = vadd.f32 %v665, %v937
    %v945 = vmul.f32 %v941, 0.5
    %v946 = vtanh.pop %v945
    %v947 = vadd.f32 %v946, 1.0
    %v948 = vmul.f32 %v947, 0.5
    %v949 = vmul.f32 %v942, 0.5
    %v950 = vtanh.pop %v949
    %v951 = vadd.f32 %v950, 1.0
    %v952 = vmul.f32 %v951, 0.5
    %v953 = vtanh.pop %v943
    %v954 = vmul.f32 %v944, 0.5
    %v955 = vtanh.pop %v954
    %v956 = vadd.f32 %v955, 1.0
    %v957 = vmul.f32 %v956, 0.5
    %v958 = vmul.f32 %v952, %v654
    %v959 = vmul.f32 %v948, %v953
    %v960 = vadd.f32 %v958, %v959
    %v961 = vtanh.pop %v960
    %v962 = vmul.f32 %v957, %v961
    %s963 = scalar_lea.vmem [#allocation9], 16
    %964 = vst [vmem:[%s963] sm:$0xff] %v962
    %s965 = scalar_lea.vmem [#allocation4], 48
    %v966 = vld [vmem:[%s965] sm:$0xff]
    %v967 = vld [vmem:[%s965 + $0x8] sm:$0xff]
    %v968 = vunpack.c.l.bf16 %v966
    %v969 = vunpack.c.h.bf16 %v966
    %v970 = vunpack.c.l.bf16 %v967
    %v971 = vunpack.c.h.bf16 %v967
    %v972 = vpack.c.bf16 %v962, %v962
    %v973 = vld [vmem:[#allocation7] sm:$0xff]
    %v974 = vld [vmem:[#allocation7 + $0x8] sm:$0xff]
    %v975 = vld [vmem:[#allocation7 + $0x10] sm:$0xff]
    %v976 = vld [vmem:[#allocation7 + $0x18] sm:$0xff]
    %v977 = vld [vmem:[#allocation7 + $0x20] sm:$0xff]
    %v978 = vld [vmem:[#allocation7 + $0x28] sm:$0xff]
    %v979 = vld [vmem:[#allocation7 + $0x30] sm:$0xff]
    %v980 = vld [vmem:[#allocation7 + $0x38] sm:$0xff]
    %v981 = vld [vmem:[#allocation7 + $0x40] sm:$0xff]
    %v982 = vld [vmem:[#allocation7 + $0x48] sm:$0xff]
    %v983 = vld [vmem:[#allocation7 + $0x50] sm:$0xff]
    %v984 = vld [vmem:[#allocation7 + $0x58] sm:$0xff]
    %v985 = vld [vmem:[#allocation7 + $0x60] sm:$0xff]
    %v986 = vld [vmem:[#allocation7 + $0x68] sm:$0xff]
    %v987 = vld [vmem:[#allocation7 + $0x70] sm:$0xff]
    %v988 = vld [vmem:[#allocation7 + $0x78] sm:$0xff]
    %v989 = vld [vmem:[#allocation7 + $0x80] sm:$0xff]
    %v990 = vld [vmem:[#allocation7 + $0x88] sm:$0xff]
    %v991 = vld [vmem:[#allocation7 + $0x90] sm:$0xff]
    %v992 = vld [vmem:[#allocation7 + $0x98] sm:$0xff]
    %v993 = vld [vmem:[#allocation7 + $0xa0] sm:$0xff]
    %v994 = vld [vmem:[#allocation7 + $0xa8] sm:$0xff]
    %v995 = vld [vmem:[#allocation7 + $0xb0] sm:$0xff]
    %v996 = vld [vmem:[#allocation7 + $0xb8] sm:$0xff]
    %v997 = vld [vmem:[#allocation7 + $0xc0] sm:$0xff]
    %v998 = vld [vmem:[#allocation7 + $0xc8] sm:$0xff]
    %v999 = vld [vmem:[#allocation7 + $0xd0] sm:$0xff]
    %v1000 = vld [vmem:[#allocation7 + $0xd8] sm:$0xff]
    %v1001 = vld [vmem:[#allocation7 + $0xe0] sm:$0xff]
    %v1002 = vld [vmem:[#allocation7 + $0xe8] sm:$0xff]
    %v1003 = vld [vmem:[#allocation7 + $0xf0] sm:$0xff]
    %v1004 = vld [vmem:[#allocation7 + $0xf8] sm:$0xff]
    %v1037 = vunpack.c.l.b16 %v973
    %v1038 = vunpack.c.h.b16 %v973
    %v1039 = vunpack.c.l.b16 %v974
    %v1040 = vunpack.c.h.b16 %v974
    %v1041 = vunpack.c.l.b16 %v975
    %v1042 = vunpack.c.h.b16 %v975
    %v1043 = vunpack.c.l.b16 %v976
    %v1044 = vunpack.c.h.b16 %v976
    %v1045 = vunpack.c.l.b16 %v977
    %v1046 = vunpack.c.h.b16 %v977
    %v1047 = vunpack.c.l.b16 %v978
    %v1048 = vunpack.c.h.b16 %v978
    %v1049 = vunpack.c.l.b16 %v979
    %v1050 = vunpack.c.h.b16 %v979
    %v1051 = vunpack.c.l.b16 %v980
    %v1052 = vunpack.c.h.b16 %v980
    %v1053 = vunpack.c.l.b16 %v981
    %v1054 = vunpack.c.h.b16 %v981
    %v1055 = vunpack.c.l.b16 %v982
    %v1056 = vunpack.c.h.b16 %v982
    %v1057 = vunpack.c.l.b16 %v983
    %v1058 = vunpack.c.h.b16 %v983
    %v1059 = vunpack.c.l.b16 %v984
    %v1060 = vunpack.c.h.b16 %v984
    %v1061 = vunpack.c.l.b16 %v985
    %v1062 = vunpack.c.h.b16 %v985
    %v1063 = vunpack.c.l.b16 %v986
    %v1064 = vunpack.c.h.b16 %v986
    %v1065 = vunpack.c.l.b16 %v987
    %v1066 = vunpack.c.h.b16 %v987
    %v1067 = vunpack.c.l.b16 %v988
    %v1068 = vunpack.c.h.b16 %v988
    %v1069 = vunpack.c.l.b16 %v989
    %v1070 = vunpack.c.h.b16 %v989
    %v1071 = vunpack.c.l.b16 %v990
    %v1072 = vunpack.c.h.b16 %v990
    %v1073 = vunpack.c.l.b16 %v991
    %v1074 = vunpack.c.h.b16 %v991
    %v1075 = vunpack.c.l.b16 %v992
    %v1076 = vunpack.c.h.b16 %v992
    %v1077 = vunpack.c.l.b16 %v993
    %v1078 = vunpack.c.h.b16 %v993
    %v1079 = vunpack.c.l.b16 %v994
    %v1080 = vunpack.c.h.b16 %v994
    %v1081 = vunpack.c.l.b16 %v995
    %v1082 = vunpack.c.h.b16 %v995
    %v1083 = vunpack.c.l.b16 %v996
    %v1084 = vunpack.c.h.b16 %v996
    %v1085 = vunpack.c.l.b16 %v997
    %v1086 = vunpack.c.h.b16 %v997
    %v1087 = vunpack.c.l.b16 %v998
    %v1088 = vunpack.c.h.b16 %v998
    %v1089 = vunpack.c.l.b16 %v999
    %v1090 = vunpack.c.h.b16 %v999
    %v1091 = vunpack.c.l.b16 %v1000
    %v1092 = vunpack.c.h.b16 %v1000
    %v1093 = vunpack.c.l.b16 %v1001
    %v1094 = vunpack.c.h.b16 %v1001
    %v1095 = vunpack.c.l.b16 %v1002
    %v1096 = vunpack.c.h.b16 %v1002
    %v1097 = vunpack.c.l.b16 %v1003
    %v1098 = vunpack.c.h.b16 %v1003
    %v1099 = vunpack.c.l.b16 %v1004
    %v1100 = vunpack.c.h.b16 %v1004
    %v1101 = vpack.c.b16 %v1041, %v1037
    %v1102 = vpack.c.b16 %v1042, %v1038
    %v1103 = vpack.c.b16 %v1043, %v1039
    %v1104 = vpack.c.b16 %v1044, %v1040
    %v1105 = vpack.c.b16 %v1049, %v1045
    %v1106 = vpack.c.b16 %v1050, %v1046
    %v1107 = vpack.c.b16 %v1051, %v1047
    %v1108 = vpack.c.b16 %v1052, %v1048
    %v1109 = vpack.c.b16 %v1057, %v1053
    %v1110 = vpack.c.b16 %v1058, %v1054
    %v1111 = vpack.c.b16 %v1059, %v1055
    %v1112 = vpack.c.b16 %v1060, %v1056
    %v1113 = vpack.c.b16 %v1065, %v1061
    %v1114 = vpack.c.b16 %v1066, %v1062
    %v1115 = vpack.c.b16 %v1067, %v1063
    %v1116 = vpack.c.b16 %v1068, %v1064
    %v1117 = vpack.c.b16 %v1073, %v1069
    %v1118 = vpack.c.b16 %v1074, %v1070
    %v1119 = vpack.c.b16 %v1075, %v1071
    %v1120 = vpack.c.b16 %v1076, %v1072
    %v1121 = vpack.c.b16 %v1081, %v1077
    %v1122 = vpack.c.b16 %v1082, %v1078
    %v1123 = vpack.c.b16 %v1083, %v1079
    %v1124 = vpack.c.b16 %v1084, %v1080
    %v1125 = vpack.c.b16 %v1089, %v1085
    %v1126 = vpack.c.b16 %v1090, %v1086
    %v1127 = vpack.c.b16 %v1091, %v1087
    %v1128 = vpack.c.b16 %v1092, %v1088
    %v1129 = vpack.c.b16 %v1097, %v1093
    %v1130 = vpack.c.b16 %v1098, %v1094
    %v1131 = vpack.c.b16 %v1099, %v1095
    %v1132 = vpack.c.b16 %v1100, %v1096
    %1165 = vmatprep.subr.bf16.mxu0 %v1102
    %1166 = vmatpush1.bf16.msra.mxu0 %v1101
    %1167 = vmatprep.subr.bf16.mxu0 %v1106
    %1168 = vmatpush1.bf16.msra.mxu0 %v1105
    %1169 = vmatprep.subr.bf16.mxu0 %v1110
    %1170 = vmatpush1.bf16.msra.mxu0 %v1109
    %1171 = vmatprep.subr.bf16.mxu0 %v1114
    %1172 = vmatpush1.bf16.msra.mxu0 %v1113
    %1173 = vmatprep.subr.bf16.mxu0 %v1118
    %1174 = vmatpush1.bf16.msra.mxu0 %v1117
    %1175 = vmatprep.subr.bf16.mxu0 %v1122
    %1176 = vmatpush1.bf16.msra.mxu0 %v1121
    %1177 = vmatprep.subr.bf16.mxu0 %v1126
    %1178 = vmatpush1.bf16.msra.mxu0 %v1125
    %1179 = vmatprep.subr.bf16.mxu0 %v1130
    %1180 = vmatpush1.bf16.msra.mxu0 %v1129
    %1181 = vmatprep.subr.bf16.mxu0 0
    %1182 = vmatpush1.bf16.msra.mxu0 0
    %1183 = vmatprep.subr.bf16.mxu0 0
    %1184 = vmatpush1.bf16.msra.mxu0 0
    %1185 = vmatprep.subr.bf16.mxu0 0
    %1186 = vmatpush1.bf16.msra.mxu0 0
    %1187 = vmatprep.subr.bf16.mxu0 0
    %1188 = vmatpush1.bf16.msra.mxu0 0
    %1189 = vmatprep.subr.bf16.mxu0 0
    %1190 = vmatpush1.bf16.msra.mxu0 0
    %1191 = vmatprep.subr.bf16.mxu0 0
    %1192 = vmatpush1.bf16.msra.mxu0 0
    %1193 = vmatprep.subr.bf16.mxu0 0
    %1194 = vmatpush1.bf16.msra.mxu0 0
    %1195 = vmatprep.subr.bf16.mxu0 0
    %1196 = vmatpush1.bf16.msra.mxu0 0
    %1197 = vmatprep.mubr.bf16.mxu0 0
    %1198 = vmatmul.mubr.bf16.gmra.mrb[0].mxu0 %v972
    %v1199 = vpop.f32.mrb[0].mxu0
    %v1200 = vadd.f32 0.0, %v1199
    %v1201 = vpop.f32.mrb[0].mxu0
    %v1202 = vadd.f32 0.0, %v1201
    %v1203 = vpop.f32.mrb[0].mxu0
    %v1204 = vpop.f32.mrb[0].mxu0
    %1205 = vdwg.mxu0
    %1206 = vmatprep.subr.bf16.mxu0 %v1104
    %1207 = vmatpush1.bf16.msra.mxu0 %v1103
    %1208 = vmatprep.subr.bf16.mxu0 %v1108
    %1209 = vmatpush1.bf16.msra.mxu0 %v1107
    %1210 = vmatprep.subr.bf16.mxu0 %v1112
    %1211 = vmatpush1.bf16.msra.mxu0 %v1111
    %1212 = vmatprep.subr.bf16.mxu0 %v1116
    %1213 = vmatpush1.bf16.msra.mxu0 %v1115
    %1214 = vmatprep.subr.bf16.mxu0 %v1120
    %1215 = vmatpush1.bf16.msra.mxu0 %v1119
    %1216 = vmatprep.subr.bf16.mxu0 %v1124
    %1217 = vmatpush1.bf16.msra.mxu0 %v1123
    %1218 = vmatprep.subr.bf16.mxu0 %v1128
    %1219 = vmatpush1.bf16.msra.mxu0 %v1127
    %1220 = vmatprep.subr.bf16.mxu0 %v1132
    %1221 = vmatpush1.bf16.msra.mxu0 %v1131
    %1222 = vmatprep.subr.bf16.mxu0 0
    %1223 = vmatpush1.bf16.msra.mxu0 0
    %1224 = vmatprep.subr.bf16.mxu0 0
    %1225 = vmatpush1.bf16.msra.mxu0 0
    %1226 = vmatprep.subr.bf16.mxu0 0
    %1227 = vmatpush1.bf16.msra.mxu0 0
    %1228 = vmatprep.subr.bf16.mxu0 0
    %1229 = vmatpush1.bf16.msra.mxu0 0
    %1230 = vmatprep.subr.bf16.mxu0 0
    %1231 = vmatpush1.bf16.msra.mxu0 0
    %1232 = vmatprep.subr.bf16.mxu0 0
    %1233 = vmatpush1.bf16.msra.mxu0 0
    %1234 = vmatprep.subr.bf16.mxu0 0
    %1235 = vmatpush1.bf16.msra.mxu0 0
    %1236 = vmatprep.subr.bf16.mxu0 0
    %1237 = vmatpush1.bf16.msra.mxu0 0
    %1238 = vmatprep.mubr.bf16.mxu0 0
    %1239 = vmatmul.mubr.bf16.gmra.mrb[0].mxu0 %v972
    %v1240 = vpop.f32.mrb[0].mxu0
    %v1241 = vadd.f32 0.0, %v1240
    %v1242 = vpop.f32.mrb[0].mxu0
    %v1243 = vadd.f32 0.0, %v1242
    %v1244 = vpop.f32.mrb[0].mxu0
    %v1245 = vpop.f32.mrb[0].mxu0
    %1246 = vdwg.mxu0
    %v1247 = vadd.f32 %v968, %v1200
    %v1248 = vadd.f32 %v969, %v1202
    %v1249 = vadd.f32 %v970, %v1241
    %v1250 = vadd.f32 %v971, %v1243
    %v1251 = vmul.f32 %v1247, 0.5
    %v1252 = vtanh.pop %v1251
    %v1253 = vadd.f32 %v1252, 1.0
    %v1254 = vmul.f32 %v1253, 0.5
    %v1255 = vmul.f32 %v1248, 0.5
    %v1256 = vtanh.pop %v1255
    %v1257 = vadd.f32 %v1256, 1.0
    %v1258 = vmul.f32 %v1257, 0.5
    %v1259 = vtanh.pop %v1249
    %v1260 = vmul.f32 %v1250, 0.5
    %v1261 = vtanh.pop %v1260
    %v1262 = vadd.f32 %v1261, 1.0
    %v1263 = vmul.f32 %v1262, 0.5
    %v1264 = vmul.f32 %v1258, %v960
    %v1265 = vmul.f32 %v1254, %v1259
    %v1266 = vadd.f32 %v1264, %v1265
    %v1267 = vtanh.pop %v1266
    %v1268 = vmul.f32 %v1263, %v1267
    %s1269 = scalar_lea.vmem [#allocation9], 24
    %1270 = vst [vmem:[%s1269] sm:$0xff] %v1268
    %s1271 = scalar_lea.vmem [#allocation4], 64
    %v1272 = vld [vmem:[%s1271] sm:$0xff]
    %v1273 = vld [vmem:[%s1271 + $0x8] sm:$0xff]
    %v1274 = vunpack.c.l.bf16 %v1272
    %v1275 = vunpack.c.h.bf16 %v1272
    %v1276 = vunpack.c.l.bf16 %v1273
    %v1277 = vunpack.c.h.bf16 %v1273
    %v1278 = vpack.c.bf16 %v1268, %v1268
    %v1279 = vld [vmem:[#allocation7] sm:$0xff]
    %v1280 = vld [vmem:[#allocation7 + $0x8] sm:$0xff]
    %v1281 = vld [vmem:[#allocation7 + $0x10] sm:$0xff]
    %v1282 = vld [vmem:[#allocation7 + $0x18] sm:$0xff]
    %v1283 = vld [vmem:[#allocation7 + $0x20] sm:$0xff]
    %v1284 = vld [vmem:[#allocation7 + $0x28] sm:$0xff]
    %v1285 = vld [vmem:[#allocation7 + $0x30] sm:$0xff]
    %v1286 = vld [vmem:[#allocation7 + $0x38] sm:$0xff]
    %v1287 = vld [vmem:[#allocation7 + $0x40] sm:$0xff]
    %v1288 = vld [vmem:[#allocation7 + $0x48] sm:$0xff]
    %v1289 = vld [vmem:[#allocation7 + $0x50] sm:$0xff]
    %v1290 = vld [vmem:[#allocation7 + $0x58] sm:$0xff]
    %v1291 = vld [vmem:[#allocation7 + $0x60] sm:$0xff]
    %v1292 = vld [vmem:[#allocation7 + $0x68] sm:$0xff]
    %v1293 = vld [vmem:[#allocation7 + $0x70] sm:$0xff]
    %v1294 = vld [vmem:[#allocation7 + $0x78] sm:$0xff]
    %v1295 = vld [vmem:[#allocation7 + $0x80] sm:$0xff]
    %v1296 = vld [vmem:[#allocation7 + $0x88] sm:$0xff]
    %v1297 = vld [vmem:[#allocation7 + $0x90] sm:$0xff]
    %v1298 = vld [vmem:[#allocation7 + $0x98] sm:$0xff]
    %v1299 = vld [vmem:[#allocation7 + $0xa0] sm:$0xff]
    %v1300 = vld [vmem:[#allocation7 + $0xa8] sm:$0xff]
    %v1301 = vld [vmem:[#allocation7 + $0xb0] sm:$0xff]
    %v1302 = vld [vmem:[#allocation7 + $0xb8] sm:$0xff]
    %v1303 = vld [vmem:[#allocation7 + $0xc0] sm:$0xff]
    %v1304 = vld [vmem:[#allocation7 + $0xc8] sm:$0xff]
    %v1305 = vld [vmem:[#allocation7 + $0xd0] sm:$0xff]
    %v1306 = vld [vmem:[#allocation7 + $0xd8] sm:$0xff]
    %v1307 = vld [vmem:[#allocation7 + $0xe0] sm:$0xff]
    %v1308 = vld [vmem:[#allocation7 + $0xe8] sm:$0xff]
    %v1309 = vld [vmem:[#allocation7 + $0xf0] sm:$0xff]
    %v1310 = vld [vmem:[#allocation7 + $0xf8] sm:$0xff]
    %v1343 = vunpack.c.l.b16 %v1279
    %v1344 = vunpack.c.h.b16 %v1279
    %v1345 = vunpack.c.l.b16 %v1280
    %v1346 = vunpack.c.h.b16 %v1280
    %v1347 = vunpack.c.l.b16 %v1281
    %v1348 = vunpack.c.h.b16 %v1281
    %v1349 = vunpack.c.l.b16 %v1282
    %v1350 = vunpack.c.h.b16 %v1282
    %v1351 = vunpack.c.l.b16 %v1283
    %v1352 = vunpack.c.h.b16 %v1283
    %v1353 = vunpack.c.l.b16 %v1284
    %v1354 = vunpack.c.h.b16 %v1284
    %v1355 = vunpack.c.l.b16 %v1285
    %v1356 = vunpack.c.h.b16 %v1285
    %v1357 = vunpack.c.l.b16 %v1286
    %v1358 = vunpack.c.h.b16 %v1286
    %v1359 = vunpack.c.l.b16 %v1287
    %v1360 = vunpack.c.h.b16 %v1287
    %v1361 = vunpack.c.l.b16 %v1288
    %v1362 = vunpack.c.h.b16 %v1288
    %v1363 = vunpack.c.l.b16 %v1289
    %v1364 = vunpack.c.h.b16 %v1289
    %v1365 = vunpack.c.l.b16 %v1290
    %v1366 = vunpack.c.h.b16 %v1290
    %v1367 = vunpack.c.l.b16 %v1291
    %v1368 = vunpack.c.h.b16 %v1291
    %v1369 = vunpack.c.l.b16 %v1292
    %v1370 = vunpack.c.h.b16 %v1292
    %v1371 = vunpack.c.l.b16 %v1293
    %v1372 = vunpack.c.h.b16 %v1293
    %v1373 = vunpack.c.l.b16 %v1294
    %v1374 = vunpack.c.h.b16 %v1294
    %v1375 = vunpack.c.l.b16 %v1295
    %v1376 = vunpack.c.h.b16 %v1295
    %v1377 = vunpack.c.l.b16 %v1296
    %v1378 = vunpack.c.h.b16 %v1296
    %v1379 = vunpack.c.l.b16 %v1297
    %v1380 = vunpack.c.h.b16 %v1297
    %v1381 = vunpack.c.l.b16 %v1298
    %v1382 = vunpack.c.h.b16 %v1298
    %v1383 = vunpack.c.l.b16 %v1299
    %v1384 = vunpack.c.h.b16 %v1299
    %v1385 = vunpack.c.l.b16 %v1300
    %v1386 = vunpack.c.h.b16 %v1300
    %v1387 = vunpack.c.l.b16 %v1301
    %v1388 = vunpack.c.h.b16 %v1301
    %v1389 = vunpack.c.l.b16 %v1302
    %v1390 = vunpack.c.h.b16 %v1302
    %v1391 = vunpack.c.l.b16 %v1303
    %v1392 = vunpack.c.h.b16 %v1303
    %v1393 = vunpack.c.l.b16 %v1304
    %v1394 = vunpack.c.h.b16 %v1304
    %v1395 = vunpack.c.l.b16 %v1305
    %v1396 = vunpack.c.h.b16 %v1305
    %v1397 = vunpack.c.l.b16 %v1306
    %v1398 = vunpack.c.h.b16 %v1306
    %v1399 = vunpack.c.l.b16 %v1307
    %v1400 = vunpack.c.h.b16 %v1307
    %v1401 = vunpack.c.l.b16 %v1308
    %v1402 = vunpack.c.h.b16 %v1308
    %v1403 = vunpack.c.l.b16 %v1309
    %v1404 = vunpack.c.h.b16 %v1309
    %v1405 = vunpack.c.l.b16 %v1310
    %v1406 = vunpack.c.h.b16 %v1310
    %v1407 = vpack.c.b16 %v1347, %v1343
    %v1408 = vpack.c.b16 %v1348, %v1344
    %v1409 = vpack.c.b16 %v1349, %v1345
    %v1410 = vpack.c.b16 %v1350, %v1346
    %v1411 = vpack.c.b16 %v1355, %v1351
    %v1412 = vpack.c.b16 %v1356, %v1352
    %v1413 = vpack.c.b16 %v1357, %v1353
    %v1414 = vpack.c.b16 %v1358, %v1354
    %v1415 = vpack.c.b16 %v1363, %v1359
    %v1416 = vpack.c.b16 %v1364, %v1360
    %v1417 = vpack.c.b16 %v1365, %v1361
    %v1418 = vpack.c.b16 %v1366, %v1362
    %v1419 = vpack.c.b16 %v1371, %v1367
    %v1420 = vpack.c.b16 %v1372, %v1368
    %v1421 = vpack.c.b16 %v1373, %v1369
    %v1422 = vpack.c.b16 %v1374, %v1370
    %v1423 = vpack.c.b16 %v1379, %v1375
    %v1424 = vpack.c.b16 %v1380, %v1376
    %v1425 = vpack.c.b16 %v1381, %v1377
    %v1426 = vpack.c.b16 %v1382, %v1378
    %v1427 = vpack.c.b16 %v1387, %v1383
    %v1428 = vpack.c.b16 %v1388, %v1384
    %v1429 = vpack.c.b16 %v1389, %v1385
    %v1430 = vpack.c.b16 %v1390, %v1386
    %v1431 = vpack.c.b16 %v1395, %v1391
    %v1432 = vpack.c.b16 %v1396, %v1392
    %v1433 = vpack.c.b16 %v1397, %v1393
    %v1434 = vpack.c.b16 %v1398, %v1394
    %v1435 = vpack.c.b16 %v1403, %v1399
    %v1436 = vpack.c.b16 %v1404, %v1400
    %v1437 = vpack.c.b16 %v1405, %v1401
    %v1438 = vpack.c.b16 %v1406, %v1402
    %1471 = vmatprep.subr.bf16.mxu0 %v1408
    %1472 = vmatpush1.bf16.msra.mxu0 %v1407
    %1473 = vmatprep.subr.bf16.mxu0 %v1412
    %1474 = vmatpush1.bf16.msra.mxu0 %v1411
    %1475 = vmatprep.subr.bf16.mxu0 %v1416
    %1476 = vmatpush1.bf16.msra.mxu0 %v1415
    %1477 = vmatprep.subr.bf16.mxu0 %v1420
    %1478 = vmatpush1.bf16.msra.mxu0 %v1419
    %1479 = vmatprep.subr.bf16.mxu0 %v1424
    %1480 = vmatpush1.bf16.msra.mxu0 %v1423
    %1481 = vmatprep.subr.bf16.mxu0 %v1428
    %1482 = vmatpush1.bf16.msra.mxu0 %v1427
    %1483 = vmatprep.subr.bf16.mxu0 %v1432
    %1484 = vmatpush1.bf16.msra.mxu0 %v1431
    %1485 = vmatprep.subr.bf16.mxu0 %v1436
    %1486 = vmatpush1.bf16.msra.mxu0 %v1435
    %1487 = vmatprep.subr.bf16.mxu0 0
    %1488 = vmatpush1.bf16.msra.mxu0 0
    %1489 = vmatprep.subr.bf16.mxu0 0
    %1490 = vmatpush1.bf16.msra.mxu0 0
    %1491 = vmatprep.subr.bf16.mxu0 0
    %1492 = vmatpush1.bf16.msra.mxu0 0
    %1493 = vmatprep.subr.bf16.mxu0 0
    %1494 = vmatpush1.bf16.msra.mxu0 0
    %1495 = vmatprep.subr.bf16.mxu0 0
    %1496 = vmatpush1.bf16.msra.mxu0 0
    %1497 = vmatprep.subr.bf16.mxu0 0
    %1498 = vmatpush1.bf16.msra.mxu0 0
    %1499 = vmatprep.subr.bf16.mxu0 0
    %1500 = vmatpush1.bf16.msra.mxu0 0
    %1501 = vmatprep.subr.bf16.mxu0 0
    %1502 = vmatpush1.bf16.msra.mxu0 0
    %1503 = vmatprep.mubr.bf16.mxu0 0
    %1504 = vmatmul.mubr.bf16.gmra.mrb[0].mxu0 %v1278
    %v1505 = vpop.f32.mrb[0].mxu0
    %v1506 = vadd.f32 0.0, %v1505
    %v1507 = vpop.f32.mrb[0].mxu0
    %v1508 = vadd.f32 0.0, %v1507
    %v1509 = vpop.f32.mrb[0].mxu0
    %v1510 = vpop.f32.mrb[0].mxu0
    %1511 = vdwg.mxu0
    %1512 = vmatprep.subr.bf16.mxu0 %v1410
    %1513 = vmatpush1.bf16.msra.mxu0 %v1409
    %1514 = vmatprep.subr.bf16.mxu0 %v1414
    %1515 = vmatpush1.bf16.msra.mxu0 %v1413
    %1516 = vmatprep.subr.bf16.mxu0 %v1418
    %1517 = vmatpush1.bf16.msra.mxu0 %v1417
    %1518 = vmatprep.subr.bf16.mxu0 %v1422
    %1519 = vmatpush1.bf16.msra.mxu0 %v1421
    %1520 = vmatprep.subr.bf16.mxu0 %v1426
    %1521 = vmatpush1.bf16.msra.mxu0 %v1425
    %1522 = vmatprep.subr.bf16.mxu0 %v1430
    %1523 = vmatpush1.bf16.msra.mxu0 %v1429
    %1524 = vmatprep.subr.bf16.mxu0 %v1434
    %1525 = vmatpush1.bf16.msra.mxu0 %v1433
    %1526 = vmatprep.subr.bf16.mxu0 %v1438
    %1527 = vmatpush1.bf16.msra.mxu0 %v1437
    %1528 = vmatprep.subr.bf16.mxu0 0
    %1529 = vmatpush1.bf16.msra.mxu0 0
    %1530 = vmatprep.subr.bf16.mxu0 0
    %1531 = vmatpush1.bf16.msra.mxu0 0
    %1532 = vmatprep.subr.bf16.mxu0 0
    %1533 = vmatpush1.bf16.msra.mxu0 0
    %1534 = vmatprep.subr.bf16.mxu0 0
    %1535 = vmatpush1.bf16.msra.mxu0 0
    %1536 = vmatprep.subr.bf16.mxu0 0
    %1537 = vmatpush1.bf16.msra.mxu0 0
    %1538 = vmatprep.subr.bf16.mxu0 0
    %1539 = vmatpush1.bf16.msra.mxu0 0
    %1540 = vmatprep.subr.bf16.mxu0 0
    %1541 = vmatpush1.bf16.msra.mxu0 0
    %1542 = vmatprep.subr.bf16.mxu0 0
    %1543 = vmatpush1.bf16.msra.mxu0 0
    %1544 = vmatprep.mubr.bf16.mxu0 0
    %1545 = vmatmul.mubr.bf16.gmra.mrb[0].mxu0 %v1278
    %v1546 = vpop.f32.mrb[0].mxu0
    %v1547 = vadd.f32 0.0, %v1546
    %v1548 = vpop.f32.mrb[0].mxu0
    %v1549 = vadd.f32 0.0, %v1548
    %v1550 = vpop.f32.mrb[0].mxu0
    %v1551 = vpop.f32.mrb[0].mxu0
    %1552 = vdwg.mxu0
    %v1553 = vadd.f32 %v1274, %v1506
    %v1554 = vadd.f32 %v1275, %v1508
    %v1555 = vadd.f32 %v1276, %v1547
    %v1556 = vadd.f32 %v1277, %v1549
    %v1557 = vmul.f32 %v1553, 0.5
    %v1558 = vtanh.pop %v1557
    %v1559 = vadd.f32 %v1558, 1.0
    %v1560 = vmul.f32 %v1559, 0.5
    %v1561 = vmul.f32 %v1554, 0.5
    %v1562 = vtanh.pop %v1561
    %v1563 = vadd.f32 %v1562, 1.0
    %v1564 = vmul.f32 %v1563, 0.5
    %v1565 = vtanh.pop %v1555
    %v1566 = vmul.f32 %v1556, 0.5
    %v1567 = vtanh.pop %v1566
    %v1568 = vadd.f32 %v1567, 1.0
    %v1569 = vmul.f32 %v1568, 0.5
    %v1570 = vmul.f32 %v1564, %v1266
    %v1571 = vmul.f32 %v1560, %v1565
    %v1572 = vadd.f32 %v1570, %v1571
    %v1573 = vtanh.pop %v1572
    %v1574 = vmul.f32 %v1569, %v1573
    %s1575 = scalar_lea.vmem [#allocation9], 32
    %1576 = vst [vmem:[%s1575] sm:$0xff] %v1574
    %s1577 = scalar_lea.vmem [#allocation4], 80
    %v1578 = vld [vmem:[%s1577] sm:$0xff]
    %v1579 = vld [vmem:[%s1577 + $0x8] sm:$0xff]
    %v1580 = vunpack.c.l.bf16 %v1578
    %v1581 = vunpack.c.h.bf16 %v1578
    %v1582 = vunpack.c.l.bf16 %v1579
    %v1583 = vunpack.c.h.bf16 %v1579
    %v1584 = vpack.c.bf16 %v1574, %v1574
    %v1585 = vld [vmem:[#allocation7] sm:$0xff]
    %v1586 = vld [vmem:[#allocation7 + $0x8] sm:$0xff]
    %v1587 = vld [vmem:[#allocation7 + $0x10] sm:$0xff]
    %v1588 = vld [vmem:[#allocation7 + $0x18] sm:$0xff]
    %v1589 = vld [vmem:[#allocation7 + $0x20] sm:$0xff]
    %v1590 = vld [vmem:[#allocation7 + $0x28] sm:$0xff]
    %v1591 = vld [vmem:[#allocation7 + $0x30] sm:$0xff]
    %v1592 = vld [vmem:[#allocation7 + $0x38] sm:$0xff]
    %v1593 = vld [vmem:[#allocation7 + $0x40] sm:$0xff]
    %v1594 = vld [vmem:[#allocation7 + $0x48] sm:$0xff]
    %v1595 = vld [vmem:[#allocation7 + $0x50] sm:$0xff]
    %v1596 = vld [vmem:[#allocation7 + $0x58] sm:$0xff]
    %v1597 = vld [vmem:[#allocation7 + $0x60] sm:$0xff]
    %v1598 = vld [vmem:[#allocation7 + $0x68] sm:$0xff]
    %v1599 = vld [vmem:[#allocation7 + $0x70] sm:$0xff]
    %v1600 = vld [vmem:[#allocation7 + $0x78] sm:$0xff]
    %v1601 = vld [vmem:[#allocation7 + $0x80] sm:$0xff]
    %v1602 = vld [vmem:[#allocation7 + $0x88] sm:$0xff]
    %v1603 = vld [vmem:[#allocation7 + $0x90] sm:$0xff]
    %v1604 = vld [vmem:[#allocation7 + $0x98] sm:$0xff]
    %v1605 = vld [vmem:[#allocation7 + $0xa0] sm:$0xff]
    %v1606 = vld [vmem:[#allocation7 + $0xa8] sm:$0xff]
    %v1607 = vld [vmem:[#allocation7 + $0xb0] sm:$0xff]
    %v1608 = vld [vmem:[#allocation7 + $0xb8] sm:$0xff]
    %v1609 = vld [vmem:[#allocation7 + $0xc0] sm:$0xff]
    %v1610 = vld [vmem:[#allocation7 + $0xc8] sm:$0xff]
    %v1611 = vld [vmem:[#allocation7 + $0xd0] sm:$0xff]
    %v1612 = vld [vmem:[#allocation7 + $0xd8] sm:$0xff]
    %v1613 = vld [vmem:[#allocation7 + $0xe0] sm:$0xff]
    %v1614 = vld [vmem:[#allocation7 + $0xe8] sm:$0xff]
    %v1615 = vld [vmem:[#allocation7 + $0xf0] sm:$0xff]
    %v1616 = vld [vmem:[#allocation7 + $0xf8] sm:$0xff]
    %v1649 = vunpack.c.l.b16 %v1585
    %v1650 = vunpack.c.h.b16 %v1585
    %v1651 = vunpack.c.l.b16 %v1586
    %v1652 = vunpack.c.h.b16 %v1586
    %v1653 = vunpack.c.l.b16 %v1587
    %v1654 = vunpack.c.h.b16 %v1587
    %v1655 = vunpack.c.l.b16 %v1588
    %v1656 = vunpack.c.h.b16 %v1588
    %v1657 = vunpack.c.l.b16 %v1589
    %v1658 = vunpack.c.h.b16 %v1589
    %v1659 = vunpack.c.l.b16 %v1590
    %v1660 = vunpack.c.h.b16 %v1590
    %v1661 = vunpack.c.l.b16 %v1591
    %v1662 = vunpack.c.h.b16 %v1591
    %v1663 = vunpack.c.l.b16 %v1592
    %v1664 = vunpack.c.h.b16 %v1592
    %v1665 = vunpack.c.l.b16 %v1593
    %v1666 = vunpack.c.h.b16 %v1593
    %v1667 = vunpack.c.l.b16 %v1594
    %v1668 = vunpack.c.h.b16 %v1594
    %v1669 = vunpack.c.l.b16 %v1595
    %v1670 = vunpack.c.h.b16 %v1595
    %v1671 = vunpack.c.l.b16 %v1596
    %v1672 = vunpack.c.h.b16 %v1596
    %v1673 = vunpack.c.l.b16 %v1597
    %v1674 = vunpack.c.h.b16 %v1597
    %v1675 = vunpack.c.l.b16 %v1598
    %v1676 = vunpack.c.h.b16 %v1598
    %v1677 = vunpack.c.l.b16 %v1599
    %v1678 = vunpack.c.h.b16 %v1599
    %v1679 = vunpack.c.l.b16 %v1600
    %v1680 = vunpack.c.h.b16 %v1600
    %v1681 = vunpack.c.l.b16 %v1601
    %v1682 = vunpack.c.h.b16 %v1601
    %v1683 = vunpack.c.l.b16 %v1602
    %v1684 = vunpack.c.h.b16 %v1602
    %v1685 = vunpack.c.l.b16 %v1603
    %v1686 = vunpack.c.h.b16 %v1603
    %v1687 = vunpack.c.l.b16 %v1604
    %v1688 = vunpack.c.h.b16 %v1604
    %v1689 = vunpack.c.l.b16 %v1605
    %v1690 = vunpack.c.h.b16 %v1605
    %v1691 = vunpack.c.l.b16 %v1606
    %v1692 = vunpack.c.h.b16 %v1606
    %v1693 = vunpack.c.l.b16 %v1607
    %v1694 = vunpack.c.h.b16 %v1607
    %v1695 = vunpack.c.l.b16 %v1608
    %v1696 = vunpack.c.h.b16 %v1608
    %v1697 = vunpack.c.l.b16 %v1609
    %v1698 = vunpack.c.h.b16 %v1609
    %v1699 = vunpack.c.l.b16 %v1610
    %v1700 = vunpack.c.h.b16 %v1610
    %v1701 = vunpack.c.l.b16 %v1611
    %v1702 = vunpack.c.h.b16 %v1611
    %v1703 = vunpack.c.l.b16 %v1612
    %v1704 = vunpack.c.h.b16 %v1612
    %v1705 = vunpack.c.l.b16 %v1613
    %v1706 = vunpack.c.h.b16 %v1613
    %v1707 = vunpack.c.l.b16 %v1614
    %v1708 = vunpack.c.h.b16 %v1614
    %v1709 = vunpack.c.l.b16 %v1615
    %v1710 = vunpack.c.h.b16 %v1615
    %v1711 = vunpack.c.l.b16 %v1616
    %v1712 = vunpack.c.h.b16 %v1616
    %v1713 = vpack.c.b16 %v1653, %v1649
    %v1714 = vpack.c.b16 %v1654, %v1650
    %v1715 = vpack.c.b16 %v1655, %v1651
    %v1716 = vpack.c.b16 %v1656, %v1652
    %v1717 = vpack.c.b16 %v1661, %v1657
    %v1718 = vpack.c.b16 %v1662, %v1658
    %v1719 = vpack.c.b16 %v1663, %v1659
    %v1720 = vpack.c.b16 %v1664, %v1660
    %v1721 = vpack.c.b16 %v1669, %v1665
    %v1722 = vpack.c.b16 %v1670, %v1666
    %v1723 = vpack.c.b16 %v1671, %v1667
    %v1724 = vpack.c.b16 %v1672, %v1668
    %v1725 = vpack.c.b16 %v1677, %v1673
    %v1726 = vpack.c.b16 %v1678, %v1674
    %v1727 = vpack.c.b16 %v1679, %v1675
    %v1728 = vpack.c.b16 %v1680, %v1676
    %v1729 = vpack.c.b16 %v1685, %v1681
    %v1730 = vpack.c.b16 %v1686, %v1682
    %v1731 = vpack.c.b16 %v1687, %v1683
    %v1732 = vpack.c.b16 %v1688, %v1684
    %v1733 = vpack.c.b16 %v1693, %v1689
    %v1734 = vpack.c.b16 %v1694, %v1690
    %v1735 = vpack.c.b16 %v1695, %v1691
    %v1736 = vpack.c.b16 %v1696, %v1692
    %v1737 = vpack.c.b16 %v1701, %v1697
    %v1738 = vpack.c.b16 %v1702, %v1698
    %v1739 = vpack.c.b16 %v1703, %v1699
    %v1740 = vpack.c.b16 %v1704, %v1700
    %v1741 = vpack.c.b16 %v1709, %v1705
    %v1742 = vpack.c.b16 %v1710, %v1706
    %v1743 = vpack.c.b16 %v1711, %v1707
    %v1744 = vpack.c.b16 %v1712, %v1708
    %1777 = vmatprep.subr.bf16.mxu0 %v1714
    %1778 = vmatpush1.bf16.msra.mxu0 %v1713
    %1779 = vmatprep.subr.bf16.mxu0 %v1718
    %1780 = vmatpush1.bf16.msra.mxu0 %v1717
    %1781 = vmatprep.subr.bf16.mxu0 %v1722
    %1782 = vmatpush1.bf16.msra.mxu0 %v1721
    %1783 = vmatprep.subr.bf16.mxu0 %v1726
    %1784 = vmatpush1.bf16.msra.mxu0 %v1725
    %1785 = vmatprep.subr.bf16.mxu0 %v1730
    %1786 = vmatpush1.bf16.msra.mxu0 %v1729
    %1787 = vmatprep.subr.bf16.mxu0 %v1734
    %1788 = vmatpush1.bf16.msra.mxu0 %v1733
    %1789 = vmatprep.subr.bf16.mxu0 %v1738
    %1790 = vmatpush1.bf16.msra.mxu0 %v1737
    %1791 = vmatprep.subr.bf16.mxu0 %v1742
    %1792 = vmatpush1.bf16.msra.mxu0 %v1741
    %1793 = vmatprep.subr.bf16.mxu0 0
    %1794 = vmatpush1.bf16.msra.mxu0 0
    %1795 = vmatprep.subr.bf16.mxu0 0
    %1796 = vmatpush1.bf16.msra.mxu0 0
    %1797 = vmatprep.subr.bf16.mxu0 0
    %1798 = vmatpush1.bf16.msra.mxu0 0
    %1799 = vmatprep.subr.bf16.mxu0 0
    %1800 = vmatpush1.bf16.msra.mxu0 0
    %1801 = vmatprep.subr.bf16.mxu0 0
    %1802 = vmatpush1.bf16.msra.mxu0 0
    %1803 = vmatprep.subr.bf16.mxu0 0
    %1804 = vmatpush1.bf16.msra.mxu0 0
    %1805 = vmatprep.subr.bf16.mxu0 0
    %1806 = vmatpush1.bf16.msra.mxu0 0
    %1807 = vmatprep.subr.bf16.mxu0 0
    %1808 = vmatpush1.bf16.msra.mxu0 0
    %1809 = vmatprep.mubr.bf16.mxu0 0
    %1810 = vmatmul.mubr.bf16.gmra.mrb[0].mxu0 %v1584
    %v1811 = vpop.f32.mrb[0].mxu0
    %v1812 = vadd.f32 0.0, %v1811
    %v1813 = vpop.f32.mrb[0].mxu0
    %v1814 = vadd.f32 0.0, %v1813
    %v1815 = vpop.f32.mrb[0].mxu0
    %v1816 = vpop.f32.mrb[0].mxu0
    %1817 = vdwg.mxu0
    %1818 = vmatprep.subr.bf16.mxu0 %v1716
    %1819 = vmatpush1.bf16.msra.mxu0 %v1715
    %1820 = vmatprep.subr.bf16.mxu0 %v1720
    %1821 = vmatpush1.bf16.msra.mxu0 %v1719
    %1822 = vmatprep.subr.bf16.mxu0 %v1724
    %1823 = vmatpush1.bf16.msra.mxu0 %v1723
    %1824 = vmatprep.subr.bf16.mxu0 %v1728
    %1825 = vmatpush1.bf16.msra.mxu0 %v1727
    %1826 = vmatprep.subr.bf16.mxu0 %v1732
    %1827 = vmatpush1.bf16.msra.mxu0 %v1731
    %1828 = vmatprep.subr.bf16.mxu0 %v1736
    %1829 = vmatpush1.bf16.msra.mxu0 %v1735
    %1830 = vmatprep.subr.bf16.mxu0 %v1740
    %1831 = vmatpush1.bf16.msra.mxu0 %v1739
    %1832 = vmatprep.subr.bf16.mxu0 %v1744
    %1833 = vmatpush1.bf16.msra.mxu0 %v1743
    %1834 = vmatprep.subr.bf16.mxu0 0
    %1835 = vmatpush1.bf16.msra.mxu0 0
    %1836 = vmatprep.subr.bf16.mxu0 0
    %1837 = vmatpush1.bf16.msra.mxu0 0
    %1838 = vmatprep.subr.bf16.mxu0 0
    %1839 = vmatpush1.bf16.msra.mxu0 0
    %1840 = vmatprep.subr.bf16.mxu0 0
    %1841 = vmatpush1.bf16.msra.mxu0 0
    %1842 = vmatprep.subr.bf16.mxu0 0
    %1843 = vmatpush1.bf16.msra.mxu0 0
    %1844 = vmatprep.subr.bf16.mxu0 0
    %1845 = vmatpush1.bf16.msra.mxu0 0
    %1846 = vmatprep.subr.bf16.mxu0 0
    %1847 = vmatpush1.bf16.msra.mxu0 0
    %1848 = vmatprep.subr.bf16.mxu0 0
    %1849 = vmatpush1.bf16.msra.mxu0 0
    %1850 = vmatprep.mubr.bf16.mxu0 0
    %1851 = vmatmul.mubr.bf16.gmra.mrb[0].mxu0 %v1584
    %v1852 = vpop.f32.mrb[0].mxu0
    %v1853 = vadd.f32 0.0, %v1852
    %v1854 = vpop.f32.mrb[0].mxu0
    %v1855 = vadd.f32 0.0, %v1854
    %v1856 = vpop.f32.mrb[0].mxu0
    %v1857 = vpop.f32.mrb[0].mxu0
    %1858 = vdwg.mxu0
    %v1859 = vadd.f32 %v1580, %v1812
    %v1860 = vadd.f32 %v1581, %v1814
    %v1861 = vadd.f32 %v1582, %v1853
    %v1862 = vadd.f32 %v1583, %v1855
    %v1863 = vmul.f32 %v1859, 0.5
    %v1864 = vtanh.pop %v1863
    %v1865 = vadd.f32 %v1864, 1.0
    %v1866 = vmul.f32 %v1865, 0.5
    %v1867 = vmul.f32 %v1860, 0.5
    %v1868 = vtanh.pop %v1867
    %v1869 = vadd.f32 %v1868, 1.0
    %v1870 = vmul.f32 %v1869, 0.5
    %v1871 = vtanh.pop %v1861
    %v1872 = vmul.f32 %v1862, 0.5
    %v1873 = vtanh.pop %v1872
    %v1874 = vadd.f32 %v1873, 1.0
    %v1875 = vmul.f32 %v1874, 0.5
    %v1876 = vmul.f32 %v1870, %v1572
    %v1877 = vmul.f32 %v1866, %v1871
    %v1878 = vadd.f32 %v1876, %v1877
    %v1879 = vtanh.pop %v1878
    %v1880 = vmul.f32 %v1875, %v1879
    %s1881 = scalar_lea.vmem [#allocation9], 40
    %1882 = vst [vmem:[%s1881] sm:$0xff] %v1880
    %s1883 = scalar_lea.vmem [#allocation4], 96
    %v1884 = vld [vmem:[%s1883] sm:$0xff]
    %v1885 = vld [vmem:[%s1883 + $0x8] sm:$0xff]
    %v1886 = vunpack.c.l.bf16 %v1884
    %v1887 = vunpack.c.h.bf16 %v1884
    %v1888 = vunpack.c.l.bf16 %v1885
    %v1889 = vunpack.c.h.bf16 %v1885
    %v1890 = vpack.c.bf16 %v1880, %v1880
    %v1891 = vld [vmem:[#allocation7] sm:$0xff]
    %v1892 = vld [vmem:[#allocation7 + $0x8] sm:$0xff]
    %v1893 = vld [vmem:[#allocation7 + $0x10] sm:$0xff]
    %v1894 = vld [vmem:[#allocation7 + $0x18] sm:$0xff]
    %v1895 = vld [vmem:[#allocation7 + $0x20] sm:$0xff]
    %v1896 = vld [vmem:[#allocation7 + $0x28] sm:$0xff]
    %v1897 = vld [vmem:[#allocation7 + $0x30] sm:$0xff]
    %v1898 = vld [vmem:[#allocation7 + $0x38] sm:$0xff]
    %v1899 = vld [vmem:[#allocation7 + $0x40] sm:$0xff]
    %v1900 = vld [vmem:[#allocation7 + $0x48] sm:$0xff]
    %v1901 = vld [vmem:[#allocation7 + $0x50] sm:$0xff]
    %v1902 = vld [vmem:[#allocation7 + $0x58] sm:$0xff]
    %v1903 = vld [vmem:[#allocation7 + $0x60] sm:$0xff]
    %v1904 = vld [vmem:[#allocation7 + $0x68] sm:$0xff]
    %v1905 = vld [vmem:[#allocation7 + $0x70] sm:$0xff]
    %v1906 = vld [vmem:[#allocation7 + $0x78] sm:$0xff]
    %v1907 = vld [vmem:[#allocation7 + $0x80] sm:$0xff]
    %v1908 = vld [vmem:[#allocation7 + $0x88] sm:$0xff]
    %v1909 = vld [vmem:[#allocation7 + $0x90] sm:$0xff]
    %v1910 = vld [vmem:[#allocation7 + $0x98] sm:$0xff]
    %v1911 = vld [vmem:[#allocation7 + $0xa0] sm:$0xff]
    %v1912 = vld [vmem:[#allocation7 + $0xa8] sm:$0xff]
    %v1913 = vld [vmem:[#allocation7 + $0xb0] sm:$0xff]
    %v1914 = vld [vmem:[#allocation7 + $0xb8] sm:$0xff]
    %v1915 = vld [vmem:[#allocation7 + $0xc0] sm:$0xff]
    %v1916 = vld [vmem:[#allocation7 + $0xc8] sm:$0xff]
    %v1917 = vld [vmem:[#allocation7 + $0xd0] sm:$0xff]
    %v1918 = vld [vmem:[#allocation7 + $0xd8] sm:$0xff]
    %v1919 = vld [vmem:[#allocation7 + $0xe0] sm:$0xff]
    %v1920 = vld [vmem:[#allocation7 + $0xe8] sm:$0xff]
    %v1921 = vld [vmem:[#allocation7 + $0xf0] sm:$0xff]
    %v1922 = vld [vmem:[#allocation7 + $0xf8] sm:$0xff]
    %v1955 = vunpack.c.l.b16 %v1891
    %v1956 = vunpack.c.h.b16 %v1891
    %v1957 = vunpack.c.l.b16 %v1892
    %v1958 = vunpack.c.h.b16 %v1892
    %v1959 = vunpack.c.l.b16 %v1893
    %v1960 = vunpack.c.h.b16 %v1893
    %v1961 = vunpack.c.l.b16 %v1894
    %v1962 = vunpack.c.h.b16 %v1894
    %v1963 = vunpack.c.l.b16 %v1895
    %v1964 = vunpack.c.h.b16 %v1895
    %v1965 = vunpack.c.l.b16 %v1896
    %v1966 = vunpack.c.h.b16 %v1896
    %v1967 = vunpack.c.l.b16 %v1897
    %v1968 = vunpack.c.h.b16 %v1897
    %v1969 = vunpack.c.l.b16 %v1898
    %v1970 = vunpack.c.h.b16 %v1898
    %v1971 = vunpack.c.l.b16 %v1899
    %v1972 = vunpack.c.h.b16 %v1899
    %v1973 = vunpack.c.l.b16 %v1900
    %v1974 = vunpack.c.h.b16 %v1900
    %v1975 = vunpack.c.l.b16 %v1901
    %v1976 = vunpack.c.h.b16 %v1901
    %v1977 = vunpack.c.l.b16 %v1902
    %v1978 = vunpack.c.h.b16 %v1902
    %v1979 = vunpack.c.l.b16 %v1903
    %v1980 = vunpack.c.h.b16 %v1903
    %v1981 = vunpack.c.l.b16 %v1904
    %v1982 = vunpack.c.h.b16 %v1904
    %v1983 = vunpack.c.l.b16 %v1905
    %v1984 = vunpack.c.h.b16 %v1905
    %v1985 = vunpack.c.l.b16 %v1906
    %v1986 = vunpack.c.h.b16 %v1906
    %v1987 = vunpack.c.l.b16 %v1907
    %v1988 = vunpack.c.h.b16 %v1907
    %v1989 = vunpack.c.l.b16 %v1908
    %v1990 = vunpack.c.h.b16 %v1908
    %v1991 = vunpack.c.l.b16 %v1909
    %v1992 = vunpack.c.h.b16 %v1909
    %v1993 = vunpack.c.l.b16 %v1910
    %v1994 = vunpack.c.h.b16 %v1910
    %v1995 = vunpack.c.l.b16 %v1911
    %v1996 = vunpack.c.h.b16 %v1911
    %v1997 = vunpack.c.l.b16 %v1912
    %v1998 = vunpack.c.h.b16 %v1912
    %v1999 = vunpack.c.l.b16 %v1913
    %v2000 = vunpack.c.h.b16 %v1913
    %v2001 = vunpack.c.l.b16 %v1914
    %v2002 = vunpack.c.h.b16 %v1914
    %v2003 = vunpack.c.l.b16 %v1915
    %v2004 = vunpack.c.h.b16 %v1915
    %v2005 = vunpack.c.l.b16 %v1916
    %v2006 = vunpack.c.h.b16 %v1916
    %v2007 = vunpack.c.l.b16 %v1917
    %v2008 = vunpack.c.h.b16 %v1917
    %v2009 = vunpack.c.l.b16 %v1918
    %v2010 = vunpack.c.h.b16 %v1918
    %v2011 = vunpack.c.l.b16 %v1919
    %v2012 = vunpack.c.h.b16 %v1919
    %v2013 = vunpack.c.l.b16 %v1920
    %v2014 = vunpack.c.h.b16 %v1920
    %v2015 = vunpack.c.l.b16 %v1921
    %v2016 = vunpack.c.h.b16 %v1921
    %v2017 = vunpack.c.l.b16 %v1922
    %v2018 = vunpack.c.h.b16 %v1922
    %v2019 = vpack.c.b16 %v1959, %v1955
    %v2020 = vpack.c.b16 %v1960, %v1956
    %v2021 = vpack.c.b16 %v1961, %v1957
    %v2022 = vpack.c.b16 %v1962, %v1958
    %v2023 = vpack.c.b16 %v1967, %v1963
    %v2024 = vpack.c.b16 %v1968, %v1964
    %v2025 = vpack.c.b16 %v1969, %v1965
    %v2026 = vpack.c.b16 %v1970, %v1966
    %v2027 = vpack.c.b16 %v1975, %v1971
    %v2028 = vpack.c.b16 %v1976, %v1972
    %v2029 = vpack.c.b16 %v1977, %v1973
    %v2030 = vpack.c.b16 %v1978, %v1974
    %v2031 = vpack.c.b16 %v1983, %v1979
    %v2032 = vpack.c.b16 %v1984, %v1980
    %v2033 = vpack.c.b16 %v1985, %v1981
    %v2034 = vpack.c.b16 %v1986, %v1982
    %v2035 = vpack.c.b16 %v1991, %v1987
    %v2036 = vpack.c.b16 %v1992, %v1988
    %v2037 = vpack.c.b16 %v1993, %v1989
    %v2038 = vpack.c.b16 %v1994, %v1990
    %v2039 = vpack.c.b16 %v1999, %v1995
    %v2040 = vpack.c.b16 %v2000, %v1996
    %v2041 = vpack.c.b16 %v2001, %v1997
    %v2042 = vpack.c.b16 %v2002, %v1998
    %v2043 = vpack.c.b16 %v2007, %v2003
    %v2044 = vpack.c.b16 %v2008, %v2004
    %v2045 = vpack.c.b16 %v2009, %v2005
    %v2046 = vpack.c.b16 %v2010, %v2006
    %v2047 = vpack.c.b16 %v2015, %v2011
    %v2048 = vpack.c.b16 %v2016, %v2012
    %v2049 = vpack.c.b16 %v2017, %v2013
    %v2050 = vpack.c.b16 %v2018, %v2014
    %2083 = vmatprep.subr.bf16.mxu0 %v2020
    %2084 = vmatpush1.bf16.msra.mxu0 %v2019
    %2085 = vmatprep.subr.bf16.mxu0 %v2024
    %2086 = vmatpush1.bf16.msra.mxu0 %v2023
    %2087 = vmatprep.subr.bf16.mxu0 %v2028
    %2088 = vmatpush1.bf16.msra.mxu0 %v2027
    %2089 = vmatprep.subr.bf16.mxu0 %v2032
    %2090 = vmatpush1.bf16.msra.mxu0 %v2031
    %2091 = vmatprep.subr.bf16.mxu0 %v2036
    %2092 = vmatpush1.bf16.msra.mxu0 %v2035
    %2093 = vmatprep.subr.bf16.mxu0 %v2040
    %2094 = vmatpush1.bf16.msra.mxu0 %v2039
    %2095 = vmatprep.subr.bf16.mxu0 %v2044
    %2096 = vmatpush1.bf16.msra.mxu0 %v2043
    %2097 = vmatprep.subr.bf16.mxu0 %v2048
    %2098 = vmatpush1.bf16.msra.mxu0 %v2047
    %2099 = vmatprep.subr.bf16.mxu0 0
    %2100 = vmatpush1.bf16.msra.mxu0 0
    %2101 = vmatprep.subr.bf16.mxu0 0
    %2102 = vmatpush1.bf16.msra.mxu0 0
    %2103 = vmatprep.subr.bf16.mxu0 0
    %2104 = vmatpush1.bf16.msra.mxu0 0
    %2105 = vmatprep.subr.bf16.mxu0 0
    %2106 = vmatpush1.bf16.msra.mxu0 0
    %2107 = vmatprep.subr.bf16.mxu0 0
    %2108 = vmatpush1.bf16.msra.mxu0 0
    %2109 = vmatprep.subr.bf16.mxu0 0
    %2110 = vmatpush1.bf16.msra.mxu0 0
    %2111 = vmatprep.subr.bf16.mxu0 0
    %2112 = vmatpush1.bf16.msra.mxu0 0
    %2113 = vmatprep.subr.bf16.mxu0 0
    %2114 = vmatpush1.bf16.msra.mxu0 0
    %2115 = vmatprep.mubr.bf16.mxu0 0
    %2116 = vmatmul.mubr.bf16.gmra.mrb[0].mxu0 %v1890
    %v2117 = vpop.f32.mrb[0].mxu0
    %v2118 = vadd.f32 0.0, %v2117
    %v2119 = vpop.f32.mrb[0].mxu0
    %v2120 = vadd.f32 0.0, %v2119
    %v2121 = vpop.f32.mrb[0].mxu0
    %v2122 = vpop.f32.mrb[0].mxu0
    %2123 = vdwg.mxu0
    %2124 = vmatprep.subr.bf16.mxu0 %v2022
    %2125 = vmatpush1.bf16.msra.mxu0 %v2021
    %2126 = vmatprep.subr.bf16.mxu0 %v2026
    %2127 = vmatpush1.bf16.msra.mxu0 %v2025
    %2128 = vmatprep.subr.bf16.mxu0 %v2030
    %2129 = vmatpush1.bf16.msra.mxu0 %v2029
    %2130 = vmatprep.subr.bf16.mxu0 %v2034
    %2131 = vmatpush1.bf16.msra.mxu0 %v2033
    %2132 = vmatprep.subr.bf16.mxu0 %v2038
    %2133 = vmatpush1.bf16.msra.mxu0 %v2037
    %2134 = vmatprep.subr.bf16.mxu0 %v2042
    %2135 = vmatpush1.bf16.msra.mxu0 %v2041
    %2136 = vmatprep.subr.bf16.mxu0 %v2046
    %2137 = vmatpush1.bf16.msra.mxu0 %v2045
    %2138 = vmatprep.subr.bf16.mxu0 %v2050
    %2139 = vmatpush1.bf16.msra.mxu0 %v2049
    %2140 = vmatprep.subr.bf16.mxu0 0
    %2141 = vmatpush1.bf16.msra.mxu0 0
    %2142 = vmatprep.subr.bf16.mxu0 0
    %2143 = vmatpush1.bf16.msra.mxu0 0
    %2144 = vmatprep.subr.bf16.mxu0 0
    %2145 = vmatpush1.bf16.msra.mxu0 0
    %2146 = vmatprep.subr.bf16.mxu0 0
    %2147 = vmatpush1.bf16.msra.mxu0 0
    %2148 = vmatprep.subr.bf16.mxu0 0
    %2149 = vmatpush1.bf16.msra.mxu0 0
    %2150 = vmatprep.subr.bf16.mxu0 0
    %2151 = vmatpush1.bf16.msra.mxu0 0
    %2152 = vmatprep.subr.bf16.mxu0 0
    %2153 = vmatpush1.bf16.msra.mxu0 0
    %2154 = vmatprep.subr.bf16.mxu0 0
    %2155 = vmatpush1.bf16.msra.mxu0 0
    %2156 = vmatprep.mubr.bf16.mxu0 0
    %2157 = vmatmul.mubr.bf16.gmra.mrb[0].mxu0 %v1890
    %v2158 = vpop.f32.mrb[0].mxu0
    %v2159 = vadd.f32 0.0, %v2158
    %v2160 = vpop.f32.mrb[0].mxu0
    %v2161 = vadd.f32 0.0, %v2160
    %v2162 = vpop.f32.mrb[0].mxu0
    %v2163 = vpop.f32.mrb[0].mxu0
    %2164 = vdwg.mxu0
    %v2165 = vadd.f32 %v1886, %v2118
    %v2166 = vadd.f32 %v1887, %v2120
    %v2167 = vadd.f32 %v1888, %v2159
    %v2168 = vadd.f32 %v1889, %v2161
    %v2169 = vmul.f32 %v2165, 0.5
    %v2170 = vtanh.pop %v2169
    %v2171 = vadd.f32 %v2170, 1.0
    %v2172 = vmul.f32 %v2171, 0.5
    %v2173 = vmul.f32 %v2166, 0.5
    %v2174 = vtanh.pop %v2173
    %v2175 = vadd.f32 %v2174, 1.0
    %v2176 = vmul.f32 %v2175, 0.5
    %v2177 = vtanh.pop %v2167
    %v2178 = vmul.f32 %v2168, 0.5
    %v2179 = vtanh.pop %v2178
    %v2180 = vadd.f32 %v2179, 1.0
    %v2181 = vmul.f32 %v2180, 0.5
    %v2182 = vmul.f32 %v2176, %v1878
    %v2183 = vmul.f32 %v2172, %v2177
    %v2184 = vadd.f32 %v2182, %v2183
    %v2185 = vtanh.pop %v2184
    %v2186 = vmul.f32 %v2181, %v2185
    %s2187 = scalar_lea.vmem [#allocation9], 48
    %2188 = vst [vmem:[%s2187] sm:$0xff] %v2186
    %s2189 = scalar_lea.vmem [#allocation4], 112
    %v2190 = vld [vmem:[%s2189] sm:$0xff]
    %v2191 = vld [vmem:[%s2189 + $0x8] sm:$0xff]
    %v2192 = vunpack.c.l.bf16 %v2190
    %v2193 = vunpack.c.h.bf16 %v2190
    %v2194 = vunpack.c.l.bf16 %v2191
    %v2195 = vunpack.c.h.bf16 %v2191
    %v2196 = vpack.c.bf16 %v2186, %v2186
    %v2197 = vld [vmem:[#allocation7] sm:$0xff]
    %v2198 = vld [vmem:[#allocation7 + $0x8] sm:$0xff]
    %v2199 = vld [vmem:[#allocation7 + $0x10] sm:$0xff]
    %v2200 = vld [vmem:[#allocation7 + $0x18] sm:$0xff]
    %v2201 = vld [vmem:[#allocation7 + $0x20] sm:$0xff]
    %v2202 = vld [vmem:[#allocation7 + $0x28] sm:$0xff]
    %v2203 = vld [vmem:[#allocation7 + $0x30] sm:$0xff]
    %v2204 = vld [vmem:[#allocation7 + $0x38] sm:$0xff]
    %v2205 = vld [vmem:[#allocation7 + $0x40] sm:$0xff]
    %v2206 = vld [vmem:[#allocation7 + $0x48] sm:$0xff]
    %v2207 = vld [vmem:[#allocation7 + $0x50] sm:$0xff]
    %v2208 = vld [vmem:[#allocation7 + $0x58] sm:$0xff]
    %v2209 = vld [vmem:[#allocation7 + $0x60] sm:$0xff]
    %v2210 = vld [vmem:[#allocation7 + $0x68] sm:$0xff]
    %v2211 = vld [vmem:[#allocation7 + $0x70] sm:$0xff]
    %v2212 = vld [vmem:[#allocation7 + $0x78] sm:$0xff]
    %v2213 = vld [vmem:[#allocation7 + $0x80] sm:$0xff]
    %v2214 = vld [vmem:[#allocation7 + $0x88] sm:$0xff]
    %v2215 = vld [vmem:[#allocation7 + $0x90] sm:$0xff]
    %v2216 = vld [vmem:[#allocation7 + $0x98] sm:$0xff]
    %v2217 = vld [vmem:[#allocation7 + $0xa0] sm:$0xff]
    %v2218 = vld [vmem:[#allocation7 + $0xa8] sm:$0xff]
    %v2219 = vld [vmem:[#allocation7 + $0xb0] sm:$0xff]
    %v2220 = vld [vmem:[#allocation7 + $0xb8] sm:$0xff]
    %v2221 = vld [vmem:[#allocation7 + $0xc0] sm:$0xff]
    %v2222 = vld [vmem:[#allocation7 + $0xc8] sm:$0xff]
    %v2223 = vld [vmem:[#allocation7 + $0xd0] sm:$0xff]
    %v2224 = vld [vmem:[#allocation7 + $0xd8] sm:$0xff]
    %v2225 = vld [vmem:[#allocation7 + $0xe0] sm:$0xff]
    %v2226 = vld [vmem:[#allocation7 + $0xe8] sm:$0xff]
    %v2227 = vld [vmem:[#allocation7 + $0xf0] sm:$0xff]
    %v2228 = vld [vmem:[#allocation7 + $0xf8] sm:$0xff]
    %v2261 = vunpack.c.l.b16 %v2197
    %v2262 = vunpack.c.h.b16 %v2197
    %v2263 = vunpack.c.l.b16 %v2198
    %v2264 = vunpack.c.h.b16 %v2198
    %v2265 = vunpack.c.l.b16 %v2199
    %v2266 = vunpack.c.h.b16 %v2199
    %v2267 = vunpack.c.l.b16 %v2200
    %v2268 = vunpack.c.h.b16 %v2200
    %v2269 = vunpack.c.l.b16 %v2201
    %v2270 = vunpack.c.h.b16 %v2201
    %v2271 = vunpack.c.l.b16 %v2202
    %v2272 = vunpack.c.h.b16 %v2202
    %v2273 = vunpack.c.l.b16 %v2203
    %v2274 = vunpack.c.h.b16 %v2203
    %v2275 = vunpack.c.l.b16 %v2204
    %v2276 = vunpack.c.h.b16 %v2204
    %v2277 = vunpack.c.l.b16 %v2205
    %v2278 = vunpack.c.h.b16 %v2205
    %v2279 = vunpack.c.l.b16 %v2206
    %v2280 = vunpack.c.h.b16 %v2206
    %v2281 = vunpack.c.l.b16 %v2207
    %v2282 = vunpack.c.h.b16 %v2207
    %v2283 = vunpack.c.l.b16 %v2208
    %v2284 = vunpack.c.h.b16 %v2208
    %v2285 = vunpack.c.l.b16 %v2209
    %v2286 = vunpack.c.h.b16 %v2209
    %v2287 = vunpack.c.l.b16 %v2210
    %v2288 = vunpack.c.h.b16 %v2210
    %v2289 = vunpack.c.l.b16 %v2211
    %v2290 = vunpack.c.h.b16 %v2211
    %v2291 = vunpack.c.l.b16 %v2212
    %v2292 = vunpack.c.h.b16 %v2212
    %v2293 = vunpack.c.l.b16 %v2213
    %v2294 = vunpack.c.h.b16 %v2213
    %v2295 = vunpack.c.l.b16 %v2214
    %v2296 = vunpack.c.h.b16 %v2214
    %v2297 = vunpack.c.l.b16 %v2215
    %v2298 = vunpack.c.h.b16 %v2215
    %v2299 = vunpack.c.l.b16 %v2216
    %v2300 = vunpack.c.h.b16 %v2216
    %v2301 = vunpack.c.l.b16 %v2217
    %v2302 = vunpack.c.h.b16 %v2217
    %v2303 = vunpack.c.l.b16 %v2218
    %v2304 = vunpack.c.h.b16 %v2218
    %v2305 = vunpack.c.l.b16 %v2219
    %v2306 = vunpack.c.h.b16 %v2219
    %v2307 = vunpack.c.l.b16 %v2220
    %v2308 = vunpack.c.h.b16 %v2220
    %v2309 = vunpack.c.l.b16 %v2221
    %v2310 = vunpack.c.h.b16 %v2221
    %v2311 = vunpack.c.l.b16 %v2222
    %v2312 = vunpack.c.h.b16 %v2222
    %v2313 = vunpack.c.l.b16 %v2223
    %v2314 = vunpack.c.h.b16 %v2223
    %v2315 = vunpack.c.l.b16 %v2224
    %v2316 = vunpack.c.h.b16 %v2224
    %v2317 = vunpack.c.l.b16 %v2225
    %v2318 = vunpack.c.h.b16 %v2225
    %v2319 = vunpack.c.l.b16 %v2226
    %v2320 = vunpack.c.h.b16 %v2226
    %v2321 = vunpack.c.l.b16 %v2227
    %v2322 = vunpack.c.h.b16 %v2227
    %v2323 = vunpack.c.l.b16 %v2228
    %v2324 = vunpack.c.h.b16 %v2228
    %v2325 = vpack.c.b16 %v2265, %v2261
    %v2326 = vpack.c.b16 %v2266, %v2262
    %v2327 = vpack.c.b16 %v2267, %v2263
    %v2328 = vpack.c.b16 %v2268, %v2264
    %v2329 = vpack.c.b16 %v2273, %v2269
    %v2330 = vpack.c.b16 %v2274, %v2270
    %v2331 = vpack.c.b16 %v2275, %v2271
    %v2332 = vpack.c.b16 %v2276, %v2272
    %v2333 = vpack.c.b16 %v2281, %v2277
    %v2334 = vpack.c.b16 %v2282, %v2278
    %v2335 = vpack.c.b16 %v2283, %v2279
    %v2336 = vpack.c.b16 %v2284, %v2280
    %v2337 = vpack.c.b16 %v2289, %v2285
    %v2338 = vpack.c.b16 %v2290, %v2286
    %v2339 = vpack.c.b16 %v2291, %v2287
    %v2340 = vpack.c.b16 %v2292, %v2288
    %v2341 = vpack.c.b16 %v2297, %v2293
    %v2342 = vpack.c.b16 %v2298, %v2294
    %v2343 = vpack.c.b16 %v2299, %v2295
    %v2344 = vpack.c.b16 %v2300, %v2296
    %v2345 = vpack.c.b16 %v2305, %v2301
    %v2346 = vpack.c.b16 %v2306, %v2302
    %v2347 = vpack.c.b16 %v2307, %v2303
    %v2348 = vpack.c.b16 %v2308, %v2304
    %v2349 = vpack.c.b16 %v2313, %v2309
    %v2350 = vpack.c.b16 %v2314, %v2310
    %v2351 = vpack.c.b16 %v2315, %v2311
    %v2352 = vpack.c.b16 %v2316, %v2312
    %v2353 = vpack.c.b16 %v2321, %v2317
    %v2354 = vpack.c.b16 %v2322, %v2318
    %v2355 = vpack.c.b16 %v2323, %v2319
    %v2356 = vpack.c.b16 %v2324, %v2320
    %2389 = vmatprep.subr.bf16.mxu0 %v2326
    %2390 = vmatpush1.bf16.msra.mxu0 %v2325
    %2391 = vmatprep.subr.bf16.mxu0 %v2330
    %2392 = vmatpush1.bf16.msra.mxu0 %v2329
    %2393 = vmatprep.subr.bf16.mxu0 %v2334
    %2394 = vmatpush1.bf16.msra.mxu0 %v2333
    %2395 = vmatprep.subr.bf16.mxu0 %v2338
    %2396 = vmatpush1.bf16.msra.mxu0 %v2337
    %2397 = vmatprep.subr.bf16.mxu0 %v2342
    %2398 = vmatpush1.bf16.msra.mxu0 %v2341
    %2399 = vmatprep.subr.bf16.mxu0 %v2346
    %2400 = vmatpush1.bf16.msra.mxu0 %v2345
    %2401 = vmatprep.subr.bf16.mxu0 %v2350
    %2402 = vmatpush1.bf16.msra.mxu0 %v2349
    %2403 = vmatprep.subr.bf16.mxu0 %v2354
    %2404 = vmatpush1.bf16.msra.mxu0 %v2353
    %2405 = vmatprep.subr.bf16.mxu0 0
    %2406 = vmatpush1.bf16.msra.mxu0 0
    %2407 = vmatprep.subr.bf16.mxu0 0
    %2408 = vmatpush1.bf16.msra.mxu0 0
    %2409 = vmatprep.subr.bf16.mxu0 0
    %2410 = vmatpush1.bf16.msra.mxu0 0
    %2411 = vmatprep.subr.bf16.mxu0 0
    %2412 = vmatpush1.bf16.msra.mxu0 0
    %2413 = vmatprep.subr.bf16.mxu0 0
    %2414 = vmatpush1.bf16.msra.mxu0 0
    %2415 = vmatprep.subr.bf16.mxu0 0
    %2416 = vmatpush1.bf16.msra.mxu0 0
    %2417 = vmatprep.subr.bf16.mxu0 0
    %2418 = vmatpush1.bf16.msra.mxu0 0
    %2419 = vmatprep.subr.bf16.mxu0 0
    %2420 = vmatpush1.bf16.msra.mxu0 0
    %2421 = vmatprep.mubr.bf16.mxu0 0
    %2422 = vmatmul.mubr.bf16.gmra.mrb[0].mxu0 %v2196
    %v2423 = vpop.f32.mrb[0].mxu0
    %v2424 = vadd.f32 0.0, %v2423
    %v2425 = vpop.f32.mrb[0].mxu0
    %v2426 = vadd.f32 0.0, %v2425
    %v2427 = vpop.f32.mrb[0].mxu0
    %v2428 = vpop.f32.mrb[0].mxu0
    %2429 = vdwg.mxu0
    %2430 = vmatprep.subr.bf16.mxu0 %v2328
    %2431 = vmatpush1.bf16.msra.mxu0 %v2327
    %2432 = vmatprep.subr.bf16.mxu0 %v2332
    %2433 = vmatpush1.bf16.msra.mxu0 %v2331
    %2434 = vmatprep.subr.bf16.mxu0 %v2336
    %2435 = vmatpush1.bf16.msra.mxu0 %v2335
    %2436 = vmatprep.subr.bf16.mxu0 %v2340
    %2437 = vmatpush1.bf16.msra.mxu0 %v2339
    %2438 = vmatprep.subr.bf16.mxu0 %v2344
    %2439 = vmatpush1.bf16.msra.mxu0 %v2343
    %2440 = vmatprep.subr.bf16.mxu0 %v2348
    %2441 = vmatpush1.bf16.msra.mxu0 %v2347
    %2442 = vmatprep.subr.bf16.mxu0 %v2352
    %2443 = vmatpush1.bf16.msra.mxu0 %v2351
    %2444 = vmatprep.subr.bf16.mxu0 %v2356
    %2445 = vmatpush1.bf16.msra.mxu0 %v2355
    %2446 = vmatprep.subr.bf16.mxu0 0
    %2447 = vmatpush1.bf16.msra.mxu0 0
    %2448 = vmatprep.subr.bf16.mxu0 0
    %2449 = vmatpush1.bf16.msra.mxu0 0
    %2450 = vmatprep.subr.bf16.mxu0 0
    %2451 = vmatpush1.bf16.msra.mxu0 0
    %2452 = vmatprep.subr.bf16.mxu0 0
    %2453 = vmatpush1.bf16.msra.mxu0 0
    %2454 = vmatprep.subr.bf16.mxu0 0
    %2455 = vmatpush1.bf16.msra.mxu0 0
    %2456 = vmatprep.subr.bf16.mxu0 0
    %2457 = vmatpush1.bf16.msra.mxu0 0
    %2458 = vmatprep.subr.bf16.mxu0 0
    %2459 = vmatpush1.bf16.msra.mxu0 0
    %2460 = vmatprep.subr.bf16.mxu0 0
    %2461 = vmatpush1.bf16.msra.mxu0 0
    %2462 = vmatprep.mubr.bf16.mxu0 0
    %2463 = vmatmul.mubr.bf16.gmra.mrb[0].mxu0 %v2196
    %v2464 = vpop.f32.mrb[0].mxu0
    %v2465 = vadd.f32 0.0, %v2464
    %v2466 = vpop.f32.mrb[0].mxu0
    %v2467 = vadd.f32 0.0, %v2466
    %v2468 = vpop.f32.mrb[0].mxu0
    %v2469 = vpop.f32.mrb[0].mxu0
    %2470 = vdwg.mxu0
    %v2471 = vadd.f32 %v2192, %v2424
    %v2472 = vadd.f32 %v2193, %v2426
    %v2473 = vadd.f32 %v2194, %v2465
    %v2474 = vadd.f32 %v2195, %v2467
    %v2475 = vmul.f32 %v2471, 0.5
    %v2476 = vtanh.pop %v2475
    %v2477 = vadd.f32 %v2476, 1.0
    %v2478 = vmul.f32 %v2477, 0.5
    %v2479 = vmul.f32 %v2472, 0.5
    %v2480 = vtanh.pop %v2479
    %v2481 = vadd.f32 %v2480, 1.0
    %v2482 = vmul.f32 %v2481, 0.5
    %v2483 = vtanh.pop %v2473
    %v2484 = vmul.f32 %v2474, 0.5
    %v2485 = vtanh.pop %v2484
    %v2486 = vadd.f32 %v2485, 1.0
    %v2487 = vmul.f32 %v2486, 0.5
    %v2488 = vmul.f32 %v2482, %v2184
    %v2489 = vmul.f32 %v2478, %v2483
    %v2490 = vadd.f32 %v2488, %v2489
    %v2491 = vtanh.pop %v2490
    %v2492 = vmul.f32 %v2487, %v2491
    %s2493 = scalar_lea.vmem [#allocation9], 56
    %2494 = vst [vmem:[%s2493] sm:$0xff] %v2492
    %2495 = vst [vmem:[#allocation2] sm:$0xff] %v2492
    %2496 = vst [vmem:[#allocation3] sm:$0xff] %v2490
    // Predicated region
    $region22: #{tpu_custom_call.1} parent=1 // pred_check
      _
    $region23: #{tpu_custom_call.1} parent=1 // pred_check_branch
      %2498 = sbr.rel (0) target = $region25
    $region24: #{tpu_custom_call.1} parent=1 // pred_region
      %s2500 = ssub.s32 1024, 1024
      %2501 = vsyncadd [#allocation6], %s2500
      %s2502 = sshll.u32 [#allocation9], 4
      %s2503 = int_to_ptr.vmem [resolvable:$true] %s2502
      %2508 = dma.vmem_to_hbm [thread:$0]  %s2503, 1024, %s2, [#allocation6], 128, 128, 8
    $region25: #{tpu_custom_call.1} parent=1 // pred_fallthru
      _
    // Predicated region
    $region26: #{tpu_custom_call.1} parent=1 // pred_check
      _
    $region27: #{tpu_custom_call.1} parent=1 // pred_check_branch
      %2510 = sbr.rel (0) target = $region29
    $region28: #{tpu_custom_call.1} parent=1 // pred_region
      %2511 = dma.done [#allocation6], 1024
    $region29: #{tpu_custom_call.1} parent=1 // pred_fallthru
      _
    %2512 = vsyncpa [#allocation5], 1
    %2513 = vsyncpa [#allocation8], 1
    %2514 = vsyncpa [#allocation6], 1

</llo_original>
